<compile_context>
chip_gen: v6e
topology: v6e:2x2x1
jax: 0.10.0
libtpu: 0.0.40
codegen_flags: <defaults>
</compile_context>

<pallas_src>
import jax
import jax.numpy as jnp
from jax.experimental import pallas as pl
from jax.experimental.pallas import tpu as pltpu

EMBED_DIM = 768
KERNEL_SIZES = (3, 4, 5)
KERNEL_NUM = 10            # Co ;  Co * len(kernel_sizes) == 30 == fc_dense_2 output
CLASS_NUM = 1
PAD = 2                    # Conv2d padding=(2, 0) along the sequence axis
LHALO = 8                  # 8-aligned left halo inside the in-kernel padded scratch
CONV_COLS = 128            # fused conv weight lane width (120 real columns, padded)
GROUP_OFFS = (0, 30, 70)   # column offset of each kernel-size group inside CONV_COLS


def _textcnn_loss_kernel(hs_ref, emb_ref, wconv_ref, wd1_ref, wd2_ref,
                         smalls_ref, lab_ref, o_ref, ypad_ref):
    f32 = jnp.float32
    B, L, D = emb_ref.shape
    Co = KERNEL_NUM

    # ---- packed small params (one lane-dense VMEM tile) ----------------------
    bd1   = smalls_ref[0:1, 0:300]          # fc_dense_1 bias     (1, 300)
    bd2   = smalls_ref[1:2, 0:3 * Co]       # fc_dense_2 bias     (1, 30)
    bconv = smalls_ref[2:3, 0:3 * Co]       # [bc3 | bc4 | bc5]   (1, 30)
    wd3   = smalls_ref[3:4, 0:3 * Co]       # fc_dense_3 weight   (1, 30)
    bd3   = smalls_ref[4:5, 0:CLASS_NUM]    # fc_dense_3 bias     (1, 1)

    # ---- sequence branch: mean over seq -> fc_dense_1 -> fc_dense_2 (MXU) ----
    seq = jnp.mean(hs_ref[...], axis=1)                                   # (B, 768)
    s1 = jnp.dot(seq, wd1_ref[...], preferred_element_type=f32) + bd1     # (B, 300)
    s2 = jnp.dot(s1, wd2_ref[...], preferred_element_type=f32) + bd2      # (B, 30)

    # ---- conv branch: ONE fused lane-dense matmul for every tap of every size
    # Y[b, l, off_f + r*Co + c] = emb[b, l, :] . W_f[out c, tap r, :]
    y = jnp.dot(emb_ref[...].reshape(B * L, D), wconv_ref[...],
                preferred_element_type=f32).reshape(B, L, CONV_COLS)

    # In-kernel zero halo along the sequence axis (replaces wrapper jnp.pad).
    # Padded position p maps to scratch row p + (LHALO - PAD); halo rows stay 0.
    ypad_ref[...] = jnp.zeros_like(ypad_ref)
    ypad_ref[:, LHALO:LHALO + L, :] = y          # 8-aligned sublane store

    # Per kernel size: shifted tap adds (VPU) + bias + ReLU + global max pool
    # (XLU), then fold the elementwise mul and fc_dense_3 (30 -> 1) projection
    # into a VPU multiply + lane reduce — no concat, no tiny N=1 matmul.
    logits = jnp.zeros((B, CLASS_NUM), f32) + bd3                         # (B, 1)
    for g, f in enumerate(KERNEL_SIZES):
        off = GROUP_OFFS[g]
        t_out = L + 2 * PAD - f + 1
        acc = jnp.zeros((B, t_out, Co), f32)
        for r in range(f):                                   # static, <= 5 taps
            s = LHALO - PAD + r
            acc = acc + ypad_ref[:, s:s + t_out, off + r * Co:off + (r + 1) * Co]
        acc = jnp.maximum(acc + bconv[:, g * Co:(g + 1) * Co], 0.0)       # bias + ReLU
        pooled_g = jnp.max(acc, axis=1)                      # global max pool (B, Co)
        # TODO(synk): nn.Dropout(0.5) on pooled features treated as identity (eval mode).
        contrib = s2[:, g * Co:(g + 1) * Co] * pooled_g * wd3[:, g * Co:(g + 1) * Co]
        logits = logits + jnp.sum(contrib, axis=-1, keepdims=True)        # (B, 1)

    # ---- numerically stable BCE-with-logits, mean reduction ------------------
    y_lab = lab_ref[...]                                                  # (B, 1)
    bce = (jnp.maximum(logits, 0.0) - logits * y_lab
           + jnp.log(1.0 + jnp.exp(-jnp.abs(logits))))
    o_ref[...] = jnp.sum(bce, keepdims=True) / bce.size                   # (1, 1)


def textcnn1_loss(hidden_states, embeddings, m_label, params):
    B, L, _ = embeddings.shape
    vmem = pl.BlockSpec(memory_space=pltpu.MemorySpace.VMEM)
    inputs = (hidden_states, embeddings, params["wconv"], params["wd1"],
              params["wd2"], params["smalls"], m_label)
    out = pl.pallas_call(
        _textcnn_loss_kernel,
        out_shape=jax.ShapeDtypeStruct((1, 1), jnp.float32),
        in_specs=[vmem] * len(inputs),
        out_specs=pl.BlockSpec(memory_space=pltpu.MemorySpace.VMEM),
        scratch_shapes=[pltpu.VMEM((B, L + 2 * LHALO, CONV_COLS), jnp.float32)],
    )(*inputs)
    return out[0, 0]


def init_params(key):
    """Deterministic init mirroring PyTorch default uniform(-1/sqrt(fan_in), ...)."""
    ks = jax.random.split(key, 16)
    Co = KERNEL_NUM

    def uni(k, shape, fan_in):
        bound = 1.0 / jnp.sqrt(jnp.float32(fan_in))
        return jax.random.uniform(k, shape, jnp.float32, -bound, bound)

    # Fused conv weight: column (off_f + r*Co + c) = Conv2d_f weight[c, 0, r, :].
    wconv = jnp.zeros((EMBED_DIM, CONV_COLS), jnp.float32)
    conv_bias = []
    for idx, f in enumerate(KERNEL_SIZES):
        fan_in = 1 * f * EMBED_DIM
        w = uni(ks[2 * idx], (Co, 1, f, EMBED_DIM), fan_in)   # torch Conv2d layout
        off = GROUP_OFFS[idx]
        for r in range(f):
            wconv = wconv.at[:, off + r * Co:off + (r + 1) * Co].set(w[:, 0, r, :].T)
        conv_bias.append(uni(ks[2 * idx + 1], (Co,), fan_in))

    # Dense layers, stored as (in, out) so the kernel does x @ W + b.
    wd1 = uni(ks[6], (EMBED_DIM, 300), EMBED_DIM)
    bd1 = uni(ks[7], (300,), EMBED_DIM)
    wd2 = uni(ks[8], (300, 3 * Co), 300)
    bd2 = uni(ks[9], (3 * Co,), 300)
    wd3 = uni(ks[10], (3 * Co, CLASS_NUM), 3 * Co)
    bd3 = uni(ks[11], (CLASS_NUM,), 3 * Co)

    # Pack every tiny parameter into one (8, 384) VMEM tile.
    smalls = jnp.zeros((8, 384), jnp.float32)
    smalls = smalls.at[0, :300].set(bd1)
    smalls = smalls.at[1, :3 * Co].set(bd2)
    smalls = smalls.at[2, :3 * Co].set(jnp.concatenate(conv_bias))
    smalls = smalls.at[3, :3 * Co].set(wd3[:, 0])
    smalls = smalls.at[4, :CLASS_NUM].set(bd3)

    return {"wconv": wconv, "wd1": wd1, "wd2": wd2, "smalls": smalls}


if __name__ == "__main__":
    key = jax.random.PRNGKey(0)
    k_hs, k_emb, k_lab, k_par = jax.random.split(key, 4)

    B, S, L = 2, 6, 8      # batch, hidden_states seq-len, sub-tokens per row
    hidden_states = jax.random.normal(k_hs, (B, S, EMBED_DIM), jnp.float32)
    embeddings = jax.random.normal(k_emb, (B, L, EMBED_DIM), jnp.float32)
    m_label = jax.random.bernoulli(k_lab, 0.5, (B, CLASS_NUM)).astype(jnp.float32)

    params = init_params(k_par)
    loss = textcnn1_loss(hidden_states, embeddings, m_label, params)
    jax.block_until_ready(loss)
    print("KERNEL_OK")
</pallas_src>

<mosaic_0001>
module attributes {stable_mosaic.version = 11 : i64} {
  func.func @_textcnn_loss_kernel(%arg0: memref<2x6x768xf32, #tpu.memory_space<vmem>>, %arg1: memref<2x8x768xf32, #tpu.memory_space<vmem>>, %arg2: memref<768x128xf32, #tpu.memory_space<vmem>>, %arg3: memref<768x300xf32, #tpu.memory_space<vmem>>, %arg4: memref<300x30xf32, #tpu.memory_space<vmem>>, %arg5: memref<8x384xf32, #tpu.memory_space<vmem>>, %arg6: memref<2x1xf32, #tpu.memory_space<vmem>>, %arg7: memref<1x1xf32, #tpu.memory_space<vmem>>, %arg8: memref<2x24x128xf32, #tpu.memory_space<vmem>>) attributes {dimension_semantics = [], scalar_prefetch = 0 : i64, scratch_operands = 1 : i64, tpu.core_type = #tpu.core_type<tc>} {
    %c0 = arith.constant 0 : index
    %c0_0 = arith.constant 0 : index
    %0 = vector.load %arg5[%c0, %c0_0] : memref<8x384xf32, #tpu.memory_space<vmem>>, vector<1x300xf32>
    %c1 = arith.constant 1 : index
    %c0_1 = arith.constant 0 : index
    %1 = vector.load %arg5[%c1, %c0_1] : memref<8x384xf32, #tpu.memory_space<vmem>>, vector<1x30xf32>
    %c2 = arith.constant 2 : index
    %c0_2 = arith.constant 0 : index
    %2 = vector.load %arg5[%c2, %c0_2] : memref<8x384xf32, #tpu.memory_space<vmem>>, vector<1x30xf32>
    %c3 = arith.constant 3 : index
    %c0_3 = arith.constant 0 : index
    %3 = vector.load %arg5[%c3, %c0_3] : memref<8x384xf32, #tpu.memory_space<vmem>>, vector<1x30xf32>
    %c4 = arith.constant 4 : index
    %c0_4 = arith.constant 0 : index
    %4 = vector.load %arg5[%c4, %c0_4] : memref<8x384xf32, #tpu.memory_space<vmem>>, vector<1x1xf32>
    %c0_5 = arith.constant 0 : index
    %c0_6 = arith.constant 0 : index
    %c0_7 = arith.constant 0 : index
    %5 = vector.load %arg0[%c0_5, %c0_6, %c0_7] : memref<2x6x768xf32, #tpu.memory_space<vmem>>, vector<2x6x768xf32>
    %cst = arith.constant dense<0.000000e+00> : vector<2x768xf32>
    %6 = vector.multi_reduction <add>, %5, %cst [1] : vector<2x6x768xf32> to vector<2x768xf32>
    %cst_8 = arith.constant 6.000000e+00 : f32
    %7 = vector.broadcast %cst_8 : f32 to vector<2x768xf32>
    %8 = arith.divf %6, %7 : vector<2x768xf32>
    %c0_9 = arith.constant 0 : index
    %c0_10 = arith.constant 0 : index
    %9 = vector.load %arg3[%c0_9, %c0_10] : memref<768x300xf32, #tpu.memory_space<vmem>>, vector<768x300xf32>
    %cst_11 = arith.constant dense<0.000000e+00> : vector<2x300xf32>
    %10 = tpu.matmul %8, %9, %cst_11 {dimension_numbers = #tpu.dot_dimension_numbers<[1], [0], [0], [1], [0, 0, 1, 1], [], []>} : vector<2x768xf32>, vector<768x300xf32>, vector<2x300xf32> -> vector<2x300xf32>
    %11 = vector.broadcast %0 : vector<1x300xf32> to vector<2x300xf32>
    %12 = arith.addf %10, %11 : vector<2x300xf32>
    %c0_12 = arith.constant 0 : index
    %c0_13 = arith.constant 0 : index
    %13 = vector.load %arg4[%c0_12, %c0_13] : memref<300x30xf32, #tpu.memory_space<vmem>>, vector<300x30xf32>
    %cst_14 = arith.constant dense<0.000000e+00> : vector<2x30xf32>
    %14 = tpu.matmul %12, %13, %cst_14 {dimension_numbers = #tpu.dot_dimension_numbers<[1], [0], [0], [1], [0, 0, 1, 1], [], []>} : vector<2x300xf32>, vector<300x30xf32>, vector<2x30xf32> -> vector<2x30xf32>
    %15 = vector.broadcast %1 : vector<1x30xf32> to vector<2x30xf32>
    %16 = arith.addf %14, %15 : vector<2x30xf32>
    %c0_15 = arith.constant 0 : index
    %c0_16 = arith.constant 0 : index
    %c0_17 = arith.constant 0 : index
    %17 = vector.load %arg1[%c0_15, %c0_16, %c0_17] : memref<2x8x768xf32, #tpu.memory_space<vmem>>, vector<2x8x768xf32>
    %18 = vector.shape_cast %17 : vector<2x8x768xf32> to vector<16x768xf32>
    %c0_18 = arith.constant 0 : index
    %c0_19 = arith.constant 0 : index
    %19 = vector.load %arg2[%c0_18, %c0_19] : memref<768x128xf32, #tpu.memory_space<vmem>>, vector<768x128xf32>
    %cst_20 = arith.constant dense<0.000000e+00> : vector<16x128xf32>
    %20 = tpu.matmul %18, %19, %cst_20 {dimension_numbers = #tpu.dot_dimension_numbers<[1], [0], [0], [1], [0, 0, 1, 1], [], []>} : vector<16x768xf32>, vector<768x128xf32>, vector<16x128xf32> -> vector<16x128xf32>
    %21 = vector.shape_cast %20 : vector<16x128xf32> to vector<2x8x128xf32>
    %cst_21 = arith.constant 0.000000e+00 : f32
    %22 = vector.broadcast %cst_21 : f32 to vector<2x24x128xf32>
    %c0_22 = arith.constant 0 : index
    %c0_23 = arith.constant 0 : index
    %c0_24 = arith.constant 0 : index
    %23 = vector.load %arg8[%c0_22, %c0_23, %c0_24] : memref<2x24x128xf32, #tpu.memory_space<vmem>>, vector<2x24x128xf32>
    tpu.vector_store %arg8[%c0_22, %c0_23, %c0_24], %22 {strides = array<i32>} : memref<2x24x128xf32, #tpu.memory_space<vmem>>, vector<2x24x128xf32>,
    %c0_25 = arith.constant 0 : index
    %c8 = arith.constant 8 : index
    %c0_26 = arith.constant 0 : index
    %24 = vector.load %arg8[%c0_25, %c8, %c0_26] : memref<2x24x128xf32, #tpu.memory_space<vmem>>, vector<2x8x128xf32>
    tpu.vector_store %arg8[%c0_25, %c8, %c0_26], %21 {strides = array<i32>} : memref<2x24x128xf32, #tpu.memory_space<vmem>>, vector<2x8x128xf32>,
    %cst_27 = arith.constant 0.000000e+00 : f32
    %25 = vector.broadcast %cst_27 : f32 to vector<2x1xf32>
    %26 = vector.broadcast %4 : vector<1x1xf32> to vector<2x1xf32>
    %27 = arith.addf %25, %26 : vector<2x1xf32>
    %cst_28 = arith.constant 0.000000e+00 : f32
    %28 = vector.broadcast %cst_28 : f32 to vector<2x10x10xf32>
    %c0_29 = arith.constant 0 : index
    %c6 = arith.constant 6 : index
    %c0_30 = arith.constant 0 : index
    %29 = vector.load %arg8[%c0_29, %c6, %c0_30] : memref<2x24x128xf32, #tpu.memory_space<vmem>>, vector<2x10x10xf32>
    %30 = arith.addf %28, %29 : vector<2x10x10xf32>
    %c0_31 = arith.constant 0 : index
    %c7 = arith.constant 7 : index
    %c10 = arith.constant 10 : index
    %31 = vector.load %arg8[%c0_31, %c7, %c10] : memref<2x24x128xf32, #tpu.memory_space<vmem>>, vector<2x10x10xf32>
    %32 = arith.addf %30, %31 : vector<2x10x10xf32>
    %c0_32 = arith.constant 0 : index
    %c8_33 = arith.constant 8 : index
    %c20 = arith.constant 20 : index
    %33 = vector.load %arg8[%c0_32, %c8_33, %c20] : memref<2x24x128xf32, #tpu.memory_space<vmem>>, vector<2x10x10xf32>
    %34 = arith.addf %32, %33 : vector<2x10x10xf32>
    %35 = vector.extract_strided_slice %2 {offsets = [0, 0], sizes = [1, 10], strides = [1, 1]} : vector<1x30xf32> to vector<1x10xf32>
    %36 = vector.shape_cast %35 : vector<1x10xf32> to vector<1x1x10xf32>
    %37 = vector.broadcast %36 : vector<1x1x10xf32> to vector<2x10x10xf32>
    %38 = arith.addf %34, %37 : vector<2x10x10xf32>
    %cst_34 = arith.constant 0.000000e+00 : f32
    %39 = vector.broadcast %cst_34 : f32 to vector<2x10x10xf32>
    %40 = arith.maximumf %38, %39 : vector<2x10x10xf32>
    %cst_35 = arith.constant dense<0xFF800000> : vector<2x10xf32>
    %41 = vector.multi_reduction <maximumf>, %40, %cst_35 [1] : vector<2x10x10xf32> to vector<2x10xf32>
    %42 = vector.extract_strided_slice %16 {offsets = [0, 0], sizes = [2, 10], strides = [1, 1]} : vector<2x30xf32> to vector<2x10xf32>
    %43 = arith.mulf %42, %41 : vector<2x10xf32>
    %44 = vector.extract_strided_slice %3 {offsets = [0, 0], sizes = [1, 10], strides = [1, 1]} : vector<1x30xf32> to vector<1x10xf32>
    %45 = vector.broadcast %44 : vector<1x10xf32> to vector<2x10xf32>
    %46 = arith.mulf %43, %45 : vector<2x10xf32>
    %cst_36 = arith.constant dense<0.000000e+00> : vector<2xf32>
    %47 = vector.multi_reduction <add>, %46, %cst_36 [1] : vector<2x10xf32> to vector<2xf32>
    %48 = vector.shape_cast %47 : vector<2xf32> to vector<2x1xf32>
    %49 = arith.addf %27, %48 : vector<2x1xf32>
    %cst_37 = arith.constant 0.000000e+00 : f32
    %50 = vector.broadcast %cst_37 : f32 to vector<2x9x10xf32>
    %c0_38 = arith.constant 0 : index
    %c6_39 = arith.constant 6 : index
    %c30 = arith.constant 30 : index
    %51 = vector.load %arg8[%c0_38, %c6_39, %c30] : memref<2x24x128xf32, #tpu.memory_space<vmem>>, vector<2x9x10xf32>
    %52 = arith.addf %50, %51 : vector<2x9x10xf32>
    %c0_40 = arith.constant 0 : index
    %c7_41 = arith.constant 7 : index
    %c40 = arith.constant 40 : index
    %53 = vector.load %arg8[%c0_40, %c7_41, %c40] : memref<2x24x128xf32, #tpu.memory_space<vmem>>, vector<2x9x10xf32>
    %54 = arith.addf %52, %53 : vector<2x9x10xf32>
    %c0_42 = arith.constant 0 : index
    %c8_43 = arith.constant 8 : index
    %c50 = arith.constant 50 : index
    %55 = vector.load %arg8[%c0_42, %c8_43, %c50] : memref<2x24x128xf32, #tpu.memory_space<vmem>>, vector<2x9x10xf32>
    %56 = arith.addf %54, %55 : vector<2x9x10xf32>
    %c0_44 = arith.constant 0 : index
    %c9 = arith.constant 9 : index
    %c60 = arith.constant 60 : index
    %57 = vector.load %arg8[%c0_44, %c9, %c60] : memref<2x24x128xf32, #tpu.memory_space<vmem>>, vector<2x9x10xf32>
    %58 = arith.addf %56, %57 : vector<2x9x10xf32>
    %59 = vector.extract_strided_slice %2 {offsets = [0, 10], sizes = [1, 10], strides = [1, 1]} : vector<1x30xf32> to vector<1x10xf32>
    %60 = vector.shape_cast %59 : vector<1x10xf32> to vector<1x1x10xf32>
    %61 = vector.broadcast %60 : vector<1x1x10xf32> to vector<2x9x10xf32>
    %62 = arith.addf %58, %61 : vector<2x9x10xf32>
    %cst_45 = arith.constant 0.000000e+00 : f32
    %63 = vector.broadcast %cst_45 : f32 to vector<2x9x10xf32>
    %64 = arith.maximumf %62, %63 : vector<2x9x10xf32>
    %cst_46 = arith.constant dense<0xFF800000> : vector<2x10xf32>
    %65 = vector.multi_reduction <maximumf>, %64, %cst_46 [1] : vector<2x9x10xf32> to vector<2x10xf32>
    %66 = vector.extract_strided_slice %16 {offsets = [0, 10], sizes = [2, 10], strides = [1, 1]} : vector<2x30xf32> to vector<2x10xf32>
    %67 = arith.mulf %66, %65 : vector<2x10xf32>
    %68 = vector.extract_strided_slice %3 {offsets = [0, 10], sizes = [1, 10], strides = [1, 1]} : vector<1x30xf32> to vector<1x10xf32>
    %69 = vector.broadcast %68 : vector<1x10xf32> to vector<2x10xf32>
    %70 = arith.mulf %67, %69 : vector<2x10xf32>
    %cst_47 = arith.constant dense<0.000000e+00> : vector<2xf32>
    %71 = vector.multi_reduction <add>, %70, %cst_47 [1] : vector<2x10xf32> to vector<2xf32>
    %72 = vector.shape_cast %71 : vector<2xf32> to vector<2x1xf32>
    %73 = arith.addf %49, %72 : vector<2x1xf32>
    %cst_48 = arith.constant 0.000000e+00 : f32
    %74 = vector.broadcast %cst_48 : f32 to vector<2x8x10xf32>
    %c0_49 = arith.constant 0 : index
    %c6_50 = arith.constant 6 : index
    %c70 = arith.constant 70 : index
    %75 = vector.load %arg8[%c0_49, %c6_50, %c70] : memref<2x24x128xf32, #tpu.memory_space<vmem>>, vector<2x8x10xf32>
    %76 = arith.addf %74, %75 : vector<2x8x10xf32>
    %c0_51 = arith.constant 0 : index
    %c7_52 = arith.constant 7 : index
    %c80 = arith.constant 80 : index
    %77 = vector.load %arg8[%c0_51, %c7_52, %c80] : memref<2x24x128xf32, #tpu.memory_space<vmem>>, vector<2x8x10xf32>
    %78 = arith.addf %76, %77 : vector<2x8x10xf32>
    %c0_53 = arith.constant 0 : index
    %c8_54 = arith.constant 8 : index
    %c90 = arith.constant 90 : index
    %79 = vector.load %arg8[%c0_53, %c8_54, %c90] : memref<2x24x128xf32, #tpu.memory_space<vmem>>, vector<2x8x10xf32>
    %80 = arith.addf %78, %79 : vector<2x8x10xf32>
    %c0_55 = arith.constant 0 : index
    %c9_56 = arith.constant 9 : index
    %c100 = arith.constant 100 : index
    %81 = vector.load %arg8[%c0_55, %c9_56, %c100] : memref<2x24x128xf32, #tpu.memory_space<vmem>>, vector<2x8x10xf32>
    %82 = arith.addf %80, %81 : vector<2x8x10xf32>
    %c0_57 = arith.constant 0 : index
    %c10_58 = arith.constant 10 : index
    %c110 = arith.constant 110 : index
    %83 = vector.load %arg8[%c0_57, %c10_58, %c110] : memref<2x24x128xf32, #tpu.memory_space<vmem>>, vector<2x8x10xf32>
    %84 = arith.addf %82, %83 : vector<2x8x10xf32>
    %85 = vector.extract_strided_slice %2 {offsets = [0, 20], sizes = [1, 10], strides = [1, 1]} : vector<1x30xf32> to vector<1x10xf32>
    %86 = vector.shape_cast %85 : vector<1x10xf32> to vector<1x1x10xf32>
    %87 = vector.broadcast %86 : vector<1x1x10xf32> to vector<2x8x10xf32>
    %88 = arith.addf %84, %87 : vector<2x8x10xf32>
    %cst_59 = arith.constant 0.000000e+00 : f32
    %89 = vector.broadcast %cst_59 : f32 to vector<2x8x10xf32>
    %90 = arith.maximumf %88, %89 : vector<2x8x10xf32>
    %cst_60 = arith.constant dense<0xFF800000> : vector<2x10xf32>
    %91 = vector.multi_reduction <maximumf>, %90, %cst_60 [1] : vector<2x8x10xf32> to vector<2x10xf32>
    %92 = vector.extract_strided_slice %16 {offsets = [0, 20], sizes = [2, 10], strides = [1, 1]} : vector<2x30xf32> to vector<2x10xf32>
    %93 = arith.mulf %92, %91 : vector<2x10xf32>
    %94 = vector.extract_strided_slice %3 {offsets = [0, 20], sizes = [1, 10], strides = [1, 1]} : vector<1x30xf32> to vector<1x10xf32>
    %95 = vector.broadcast %94 : vector<1x10xf32> to vector<2x10xf32>
    %96 = arith.mulf %93, %95 : vector<2x10xf32>
    %cst_61 = arith.constant dense<0.000000e+00> : vector<2xf32>
    %97 = vector.multi_reduction <add>, %96, %cst_61 [1] : vector<2x10xf32> to vector<2xf32>
    %98 = vector.shape_cast %97 : vector<2xf32> to vector<2x1xf32>
    %99 = arith.addf %73, %98 : vector<2x1xf32>
    %c0_62 = arith.constant 0 : index
    %c0_63 = arith.constant 0 : index
    %100 = vector.load %arg6[%c0_62, %c0_63] : memref<2x1xf32, #tpu.memory_space<vmem>>, vector<2x1xf32>
    %cst_64 = arith.constant 0.000000e+00 : f32
    %101 = vector.broadcast %cst_64 : f32 to vector<2x1xf32>
    %102 = arith.maximumf %99, %101 : vector<2x1xf32>
    %103 = arith.mulf %99, %100 : vector<2x1xf32>
    %104 = arith.subf %102, %103 : vector<2x1xf32>
    %105 = math.absf %99 : vector<2x1xf32>
    %cst_65 = arith.constant 0.000000e+00 : f32
    %106 = vector.broadcast %cst_65 : f32 to vector<2x1xf32>
    %107 = arith.subf %106, %105 : vector<2x1xf32>
    %108 = math.exp %107 : vector<2x1xf32>
    %cst_66 = arith.constant 1.000000e+00 : f32
    %109 = vector.broadcast %cst_66 : f32 to vector<2x1xf32>
    %110 = arith.addf %109, %108 : vector<2x1xf32>
    %111 = math.log %110 : vector<2x1xf32>
    %112 = arith.addf %104, %111 : vector<2x1xf32>
    %113 = vector.shape_cast %112 : vector<2x1xf32> to vector<1x2x1xf32>
    %cst_67 = arith.constant dense<0.000000e+00> : vector<1xf32>
    %114 = vector.multi_reduction <add>, %113, %cst_67 [1, 2] : vector<1x2x1xf32> to vector<1xf32>
    %115 = vector.shape_cast %114 : vector<1xf32> to vector<1x1x1xf32>
    %116 = vector.extract %115[0, 0, 0] : f32 from vector<1x1x1xf32>
    %117 = vector.broadcast %116 : f32 to vector<1x1xf32>
    %cst_68 = arith.constant 2.000000e+00 : f32
    %118 = vector.broadcast %cst_68 : f32 to vector<1x1xf32>
    %119 = arith.divf %117, %118 : vector<1x1xf32>
    %c0_69 = arith.constant 0 : index
    %c0_70 = arith.constant 0 : index
    %120 = vector.load %arg7[%c0_69, %c0_70] : memref<1x1xf32, #tpu.memory_space<vmem>>, vector<1x1xf32>
    tpu.vector_store %arg7[%c0_69, %c0_70], %119 {strides = array<i32>} : memref<1x1xf32, #tpu.memory_space<vmem>>, vector<1x1xf32>,
    return
  }
}

</mosaic_0001>

<llo_original>
// kernel: tpu_custom_call.1
$region0: #{tpu_custom_call.1}
  #allocation0 [shape = 'u32[]', space=smem, size = 0x4, offset = 0x4, fixed_abs, tag = 'smem constant byte address 0x4 - core index']
  #allocation1 [shape = 'u32[144,128]{1,0:T(1,128)}', space=vmem, size = 0x12000, scoped, tag = 'internal scratch']
  #allocation2 [shape = 'f32[2,24,128]{2,1,0:T(8,128)}', space=vmem, size = 0x6000, scoped, tag = 'scratch operand']
  %s0 = inlined_call_operand.vmem [shape: f32[2,6,768], index: 0, kind: input, shape index: {}]
  %s1 = inlined_call_operand.vmem [shape: f32[2,8,768], index: 1, kind: input, shape index: {}]
  %s2 = inlined_call_operand.vmem [shape: f32[768,128], index: 2, kind: input, shape index: {}]
  %s3 = inlined_call_operand.vmem [shape: f32[768,300], index: 3, kind: input, shape index: {}]
  %s4 = inlined_call_operand.vmem [shape: f32[300,30], index: 4, kind: input, shape index: {}]
  %s5 = inlined_call_operand.vmem [shape: f32[8,384], index: 5, kind: input, shape index: {}]
  %s6 = inlined_call_operand.vmem [shape: f32[2,1], index: 6, kind: input, shape index: {}]
  %s7 = inlined_call_operand.hbm [shape: f32[1,1], index: 7, kind: output, shape index: {}]
  %s8 = sld [smem:[#allocation0]]
  $region38: #{tpu_custom_call.1} parent=0
    _
  %s10 = ssub.s32 1, %s8
  %s11 = scalar_select 0, %s10, %s8
  $region1: #{tpu_custom_call.1} parent=0
    #allocation3 [shape = 'u8[512]{0}', space=vmem, size = 0x400, scoped, tag = 'output window, operand 0, single buffered']
    #allocation4 [shape = 's32[1]{0}', space=sflag, size = 0x4, scoped, tag = 'scoped memory for tpu_custom_call.1']
    %12 = vsyncpa [#allocation4], 0
    // Predicated region
    $region2: #{tpu_custom_call.1} parent=1 // pred_check
      _
    $region3: #{tpu_custom_call.1} parent=1 // pred_check_branch
      %14 = sbr.rel (0) target = $region5
    $region4: #{tpu_custom_call.1} parent=1 // pred_region
      _
    $region5: #{tpu_custom_call.1} parent=1 // pred_fallthru
      _
    // Predicated region
    $region6: #{tpu_custom_call.1} parent=1 // pred_check
      _
    $region7: #{tpu_custom_call.1} parent=1 // pred_check_branch
      %16 = sbr.rel (0) target = $region9
    $region8: #{tpu_custom_call.1} parent=1 // pred_region
      _
    $region9: #{tpu_custom_call.1} parent=1 // pred_fallthru
      _
    // Predicated region
    $region10: #{tpu_custom_call.1} parent=1 // pred_check
      _
    $region11: #{tpu_custom_call.1} parent=1 // pred_check_branch
      %18 = sbr.rel (0) target = $region13
    $region12: #{tpu_custom_call.1} parent=1 // pred_region
      _
    $region13: #{tpu_custom_call.1} parent=1 // pred_fallthru
      _
    // Predicated region
    $region14: #{tpu_custom_call.1} parent=1 // pred_check
      _
    $region15: #{tpu_custom_call.1} parent=1 // pred_check_branch
      %20 = sbr.rel (0) target = $region17
    $region16: #{tpu_custom_call.1} parent=1 // pred_region
      _
    $region17: #{tpu_custom_call.1} parent=1 // pred_fallthru
      _
    // Predicated region
    $region18: #{tpu_custom_call.1} parent=1 // pred_check
      _
    $region19: #{tpu_custom_call.1} parent=1 // pred_check_branch
      %22 = sbr.rel (0) target = $region21
    $region20: #{tpu_custom_call.1} parent=1 // pred_region
      _
    $region21: #{tpu_custom_call.1} parent=1 // pred_fallthru
      _
    // Predicated region
    $region22: #{tpu_custom_call.1} parent=1 // pred_check
      _
    $region23: #{tpu_custom_call.1} parent=1 // pred_check_branch
      %24 = sbr.rel (0) target = $region25
    $region24: #{tpu_custom_call.1} parent=1 // pred_region
      _
    $region25: #{tpu_custom_call.1} parent=1 // pred_fallthru
      _
    // Predicated region
    $region26: #{tpu_custom_call.1} parent=1 // pred_check
      _
    $region27: #{tpu_custom_call.1} parent=1 // pred_check_branch
      %26 = sbr.rel (0) target = $region29
    $region28: #{tpu_custom_call.1} parent=1 // pred_region
      _
    $region29: #{tpu_custom_call.1} parent=1 // pred_fallthru
      _
    %v27 = vld [vmem:[%s5] ss:$8 sm:$0x7]
    %v28 = vld [vmem:[%s5 + $0x1] ss:$0 sm:$0xff]
    %v29 = vld [vmem:[%s5 + $0x2] ss:$0 sm:$0xff]
    %v30 = vld [vmem:[%s5 + $0x3] ss:$0 sm:$0xff]
    %v31 = vld [vmem:[%s5 + $0x4] ss:$0 sm:$0xff]
    %v32 = vld [vmem:[%s0] sm:$0x3f]
    %v33 = vld [vmem:[%s0 + $0x8] sm:$0x3f]
    %v34 = vld [vmem:[%s0 + $0x10] sm:$0x3f]
    %v35 = vld [vmem:[%s0 + $0x18] sm:$0x3f]
    %v36 = vld [vmem:[%s0 + $0x20] sm:$0x3f]
    %v37 = vld [vmem:[%s0 + $0x28] sm:$0x3f]
    %v38 = vld [vmem:[%s0 + $0x30] sm:$0x3f]
    %v39 = vld [vmem:[%s0 + $0x38] sm:$0x3f]
    %v40 = vld [vmem:[%s0 + $0x40] sm:$0x3f]
    %v41 = vld [vmem:[%s0 + $0x48] sm:$0x3f]
    %v42 = vld [vmem:[%s0 + $0x50] sm:$0x3f]
    %v43 = vld [vmem:[%s0 + $0x58] sm:$0x3f]
    %vm44 = vcmask 1045504
    %v45 = vsel %vm44, %v32, 0.0
    %v46 = vrot.slane %v45, 4
    %v47 = vadd.f32 %v45, %v46
    %v48 = vrot.slane %v47, 2
    %v49 = vadd.f32 %v47, %v48
    %v50 = vrot.slane %v49, 1
    %v51 = vadd.f32 %v49, %v50
    %v52 = vsel %vm44, %v33, 0.0
    %v53 = vrot.slane %v52, 4
    %v54 = vadd.f32 %v52, %v53
    %v55 = vrot.slane %v54, 2
    %v56 = vadd.f32 %v54, %v55
    %v57 = vrot.slane %v56, 1
    %v58 = vadd.f32 %v56, %v57
    %v59 = vsel %vm44, %v34, 0.0
    %v60 = vrot.slane %v59, 4
    %v61 = vadd.f32 %v59, %v60
    %v62 = vrot.slane %v61, 2
    %v63 = vadd.f32 %v61, %v62
    %v64 = vrot.slane %v63, 1
    %v65 = vadd.f32 %v63, %v64
    %v66 = vsel %vm44, %v35, 0.0
    %v67 = vrot.slane %v66, 4
    %v68 = vadd.f32 %v66, %v67
    %v69 = vrot.slane %v68, 2
    %v70 = vadd.f32 %v68, %v69
    %v71 = vrot.slane %v70, 1
    %v72 = vadd.f32 %v70, %v71
    %v73 = vsel %vm44, %v36, 0.0
    %v74 = vrot.slane %v73, 4
    %v75 = vadd.f32 %v73, %v74
    %v76 = vrot.slane %v75, 2
    %v77 = vadd.f32 %v75, %v76
    %v78 = vrot.slane %v77, 1
    %v79 = vadd.f32 %v77, %v78
    %v80 = vsel %vm44, %v37, 0.0
    %v81 = vrot.slane %v80, 4
    %v82 = vadd.f32 %v80, %v81
    %v83 = vrot.slane %v82, 2
    %v84 = vadd.f32 %v82, %v83
    %v85 = vrot.slane %v84, 1
    %v86 = vadd.f32 %v84, %v85
    %v87 = vsel %vm44, %v38, 0.0
    %v88 = vrot.slane %v87, 4
    %v89 = vadd.f32 %v87, %v88
    %v90 = vrot.slane %v89, 2
    %v91 = vadd.f32 %v89, %v90
    %v92 = vrot.slane %v91, 1
    %v93 = vadd.f32 %v91, %v92
    %v94 = vsel %vm44, %v39, 0.0
    %v95 = vrot.slane %v94, 4
    %v96 = vadd.f32 %v94, %v95
    %v97 = vrot.slane %v96, 2
    %v98 = vadd.f32 %v96, %v97
    %v99 = vrot.slane %v98, 1
    %v100 = vadd.f32 %v98, %v99
    %v101 = vsel %vm44, %v40, 0.0
    %v102 = vrot.slane %v101, 4
    %v103 = vadd.f32 %v101, %v102
    %v104 = vrot.slane %v103, 2
    %v105 = vadd.f32 %v103, %v104
    %v106 = vrot.slane %v105, 1
    %v107 = vadd.f32 %v105, %v106
    %v108 = vsel %vm44, %v41, 0.0
    %v109 = vrot.slane %v108, 4
    %v110 = vadd.f32 %v108, %v109
    %v111 = vrot.slane %v110, 2
    %v112 = vadd.f32 %v110, %v111
    %v113 = vrot.slane %v112, 1
    %v114 = vadd.f32 %v112, %v113
    %v115 = vsel %vm44, %v42, 0.0
    %v116 = vrot.slane %v115, 4
    %v117 = vadd.f32 %v115, %v116
    %v118 = vrot.slane %v117, 2
    %v119 = vadd.f32 %v117, %v118
    %v120 = vrot.slane %v119, 1
    %v121 = vadd.f32 %v119, %v120
    %v122 = vsel %vm44, %v43, 0.0
    %v123 = vrot.slane %v122, 4
    %v124 = vadd.f32 %v122, %v123
    %v125 = vrot.slane %v124, 2
    %v126 = vadd.f32 %v124, %v125
    %v127 = vrot.slane %v126, 1
    %v128 = vadd.f32 %v126, %v127
    %v129 = vrcp.pop 6.0
    %v130 = vmul.f32 %v51, %v129
    %v131 = vmul.f32 %v58, %v129
    %v132 = vmul.f32 %v65, %v129
    %v133 = vmul.f32 %v72, %v129
    %v134 = vmul.f32 %v79, %v129
    %v135 = vmul.f32 %v86, %v129
    %v136 = vmul.f32 %v93, %v129
    %v137 = vmul.f32 %v100, %v129
    %v138 = vmul.f32 %v107, %v129
    %v139 = vmul.f32 %v114, %v129
    %v140 = vmul.f32 %v121, %v129
    %v141 = vmul.f32 %v128, %v129
    %v142 = vld [vmem:[%s3] sm:$0xff]
    %v143 = vld [vmem:[%s3 + $0x8] sm:$0xff]
    %v144 = vld [vmem:[%s3 + $0x10] sm:$0xff]
    %v145 = vld [vmem:[%s3 + $0x18] sm:$0xff]
    %v146 = vld [vmem:[%s3 + $0x20] sm:$0xff]
    %v147 = vld [vmem:[%s3 + $0x28] sm:$0xff]
    %v148 = vld [vmem:[%s3 + $0x30] sm:$0xff]
    %v149 = vld [vmem:[%s3 + $0x38] sm:$0xff]
    %v150 = vld [vmem:[%s3 + $0x40] sm:$0xff]
    %v151 = vld [vmem:[%s3 + $0x48] sm:$0xff]
    %v152 = vld [vmem:[%s3 + $0x50] sm:$0xff]
    %v153 = vld [vmem:[%s3 + $0x58] sm:$0xff]
    %v154 = vld [vmem:[%s3 + $0x60] sm:$0xff]
    %v155 = vld [vmem:[%s3 + $0x68] sm:$0xff]
    %v156 = vld [vmem:[%s3 + $0x70] sm:$0xff]
    %v157 = vld [vmem:[%s3 + $0x78] sm:$0xff]
    %v158 = vld [vmem:[%s3 + $0x80] sm:$0xff]
    %v159 = vld [vmem:[%s3 + $0x88] sm:$0xff]
    %v160 = vld [vmem:[%s3 + $0x90] sm:$0xff]
    %v161 = vld [vmem:[%s3 + $0x98] sm:$0xff]
    %v162 = vld [vmem:[%s3 + $0xa0] sm:$0xff]
    %v163 = vld [vmem:[%s3 + $0xa8] sm:$0xff]
    %v164 = vld [vmem:[%s3 + $0xb0] sm:$0xff]
    %v165 = vld [vmem:[%s3 + $0xb8] sm:$0xff]
    %v166 = vld [vmem:[%s3 + $0xc0] sm:$0xff]
    %v167 = vld [vmem:[%s3 + $0xc8] sm:$0xff]
    %v168 = vld [vmem:[%s3 + $0xd0] sm:$0xff]
    %v169 = vld [vmem:[%s3 + $0xd8] sm:$0xff]
    %v170 = vld [vmem:[%s3 + $0xe0] sm:$0xff]
    %v171 = vld [vmem:[%s3 + $0xe8] sm:$0xff]
    %v172 = vld [vmem:[%s3 + $0xf0] sm:$0xff]
    %v173 = vld [vmem:[%s3 + $0xf8] sm:$0xff]
    %v174 = vld [vmem:[%s3 + $0x100] sm:$0xff]
    %v175 = vld [vmem:[%s3 + $0x108] sm:$0xff]
    %v176 = vld [vmem:[%s3 + $0x110] sm:$0xff]
    %v177 = vld [vmem:[%s3 + $0x118] sm:$0xff]
    %v178 = vld [vmem:[%s3 + $0x120] sm:$0xff]
    %v179 = vld [vmem:[%s3 + $0x128] sm:$0xff]
    %v180 = vld [vmem:[%s3 + $0x130] sm:$0xff]
    %v181 = vld [vmem:[%s3 + $0x138] sm:$0xff]
    %v182 = vld [vmem:[%s3 + $0x140] sm:$0xff]
    %v183 = vld [vmem:[%s3 + $0x148] sm:$0xff]
    %v184 = vld [vmem:[%s3 + $0x150] sm:$0xff]
    %v185 = vld [vmem:[%s3 + $0x158] sm:$0xff]
    %v186 = vld [vmem:[%s3 + $0x160] sm:$0xff]
    %v187 = vld [vmem:[%s3 + $0x168] sm:$0xff]
    %v188 = vld [vmem:[%s3 + $0x170] sm:$0xff]
    %v189 = vld [vmem:[%s3 + $0x178] sm:$0xff]
    %v190 = vld [vmem:[%s3 + $0x180] sm:$0xff]
    %v191 = vld [vmem:[%s3 + $0x188] sm:$0xff]
    %v192 = vld [vmem:[%s3 + $0x190] sm:$0xff]
    %v193 = vld [vmem:[%s3 + $0x198] sm:$0xff]
    %v194 = vld [vmem:[%s3 + $0x1a0] sm:$0xff]
    %v195 = vld [vmem:[%s3 + $0x1a8] sm:$0xff]
    %v196 = vld [vmem:[%s3 + $0x1b0] sm:$0xff]
    %v197 = vld [vmem:[%s3 + $0x1b8] sm:$0xff]
    %v198 = vld [vmem:[%s3 + $0x1c0] sm:$0xff]
    %v199 = vld [vmem:[%s3 + $0x1c8] sm:$0xff]
    %v200 = vld [vmem:[%s3 + $0x1d0] sm:$0xff]
    %v201 = vld [vmem:[%s3 + $0x1d8] sm:$0xff]
    %v202 = vld [vmem:[%s3 + $0x1e0] sm:$0xff]
    %v203 = vld [vmem:[%s3 + $0x1e8] sm:$0xff]
    %v204 = vld [vmem:[%s3 + $0x1f0] sm:$0xff]
    %v205 = vld [vmem:[%s3 + $0x1f8] sm:$0xff]
    %v206 = vld [vmem:[%s3 + $0x200] sm:$0xff]
    %v207 = vld [vmem:[%s3 + $0x208] sm:$0xff]
    %v208 = vld [vmem:[%s3 + $0x210] sm:$0xff]
    %v209 = vld [vmem:[%s3 + $0x218] sm:$0xff]
    %v210 = vld [vmem:[%s3 + $0x220] sm:$0xff]
    %v211 = vld [vmem:[%s3 + $0x228] sm:$0xff]
    %v212 = vld [vmem:[%s3 + $0x230] sm:$0xff]
    %v213 = vld [vmem:[%s3 + $0x238] sm:$0xff]
    %v214 = vld [vmem:[%s3 + $0x240] sm:$0xff]
    %v215 = vld [vmem:[%s3 + $0x248] sm:$0xff]
    %v216 = vld [vmem:[%s3 + $0x250] sm:$0xff]
    %v217 = vld [vmem:[%s3 + $0x258] sm:$0xff]
    %v218 = vld [vmem:[%s3 + $0x260] sm:$0xff]
    %v219 = vld [vmem:[%s3 + $0x268] sm:$0xff]
    %v220 = vld [vmem:[%s3 + $0x270] sm:$0xff]
    %v221 = vld [vmem:[%s3 + $0x278] sm:$0xff]
    %v222 = vld [vmem:[%s3 + $0x280] sm:$0xff]
    %v223 = vld [vmem:[%s3 + $0x288] sm:$0xff]
    %v224 = vld [vmem:[%s3 + $0x290] sm:$0xff]
    %v225 = vld [vmem:[%s3 + $0x298] sm:$0xff]
    %v226 = vld [vmem:[%s3 + $0x2a0] sm:$0xff]
    %v227 = vld [vmem:[%s3 + $0x2a8] sm:$0xff]
    %v228 = vld [vmem:[%s3 + $0x2b0] sm:$0xff]
    %v229 = vld [vmem:[%s3 + $0x2b8] sm:$0xff]
    %v230 = vld [vmem:[%s3 + $0x2c0] sm:$0xff]
    %v231 = vld [vmem:[%s3 + $0x2c8] sm:$0xff]
    %v232 = vld [vmem:[%s3 + $0x2d0] sm:$0xff]
    %v233 = vld [vmem:[%s3 + $0x2d8] sm:$0xff]
    %v234 = vld [vmem:[%s3 + $0x2e0] sm:$0xff]
    %v235 = vld [vmem:[%s3 + $0x2e8] sm:$0xff]
    %v236 = vld [vmem:[%s3 + $0x2f0] sm:$0xff]
    %v237 = vld [vmem:[%s3 + $0x2f8] sm:$0xff]
    %v238 = vld [vmem:[%s3 + $0x300] sm:$0xff]
    %v239 = vld [vmem:[%s3 + $0x308] sm:$0xff]
    %v240 = vld [vmem:[%s3 + $0x310] sm:$0xff]
    %v241 = vld [vmem:[%s3 + $0x318] sm:$0xff]
    %v242 = vld [vmem:[%s3 + $0x320] sm:$0xff]
    %v243 = vld [vmem:[%s3 + $0x328] sm:$0xff]
    %v244 = vld [vmem:[%s3 + $0x330] sm:$0xff]
    %v245 = vld [vmem:[%s3 + $0x338] sm:$0xff]
    %v246 = vld [vmem:[%s3 + $0x340] sm:$0xff]
    %v247 = vld [vmem:[%s3 + $0x348] sm:$0xff]
    %v248 = vld [vmem:[%s3 + $0x350] sm:$0xff]
    %v249 = vld [vmem:[%s3 + $0x358] sm:$0xff]
    %v250 = vld [vmem:[%s3 + $0x360] sm:$0xff]
    %v251 = vld [vmem:[%s3 + $0x368] sm:$0xff]
    %v252 = vld [vmem:[%s3 + $0x370] sm:$0xff]
    %v253 = vld [vmem:[%s3 + $0x378] sm:$0xff]
    %v254 = vld [vmem:[%s3 + $0x380] sm:$0xff]
    %v255 = vld [vmem:[%s3 + $0x388] sm:$0xff]
    %v256 = vld [vmem:[%s3 + $0x390] sm:$0xff]
    %v257 = vld [vmem:[%s3 + $0x398] sm:$0xff]
    %v258 = vld [vmem:[%s3 + $0x3a0] sm:$0xff]
    %v259 = vld [vmem:[%s3 + $0x3a8] sm:$0xff]
    %v260 = vld [vmem:[%s3 + $0x3b0] sm:$0xff]
    %v261 = vld [vmem:[%s3 + $0x3b8] sm:$0xff]
    %v262 = vld [vmem:[%s3 + $0x3c0] sm:$0xff]
    %v263 = vld [vmem:[%s3 + $0x3c8] sm:$0xff]
    %v264 = vld [vmem:[%s3 + $0x3d0] sm:$0xff]
    %v265 = vld [vmem:[%s3 + $0x3d8] sm:$0xff]
    %v266 = vld [vmem:[%s3 + $0x3e0] sm:$0xff]
    %v267 = vld [vmem:[%s3 + $0x3e8] sm:$0xff]
    %v268 = vld [vmem:[%s3 + $0x3f0] sm:$0xff]
    %v269 = vld [vmem:[%s3 + $0x3f8] sm:$0xff]
    %v270 = vld [vmem:[%s3 + $0x400] sm:$0xff]
    %v271 = vld [vmem:[%s3 + $0x408] sm:$0xff]
    %v272 = vld [vmem:[%s3 + $0x410] sm:$0xff]
    %v273 = vld [vmem:[%s3 + $0x418] sm:$0xff]
    %v274 = vld [vmem:[%s3 + $0x420] sm:$0xff]
    %v275 = vld [vmem:[%s3 + $0x428] sm:$0xff]
    %v276 = vld [vmem:[%s3 + $0x430] sm:$0xff]
    %v277 = vld [vmem:[%s3 + $0x438] sm:$0xff]
    %v278 = vld [vmem:[%s3 + $0x440] sm:$0xff]
    %v279 = vld [vmem:[%s3 + $0x448] sm:$0xff]
    %v280 = vld [vmem:[%s3 + $0x450] sm:$0xff]
    %v281 = vld [vmem:[%s3 + $0x458] sm:$0xff]
    %v282 = vld [vmem:[%s3 + $0x460] sm:$0xff]
    %v283 = vld [vmem:[%s3 + $0x468] sm:$0xff]
    %v284 = vld [vmem:[%s3 + $0x470] sm:$0xff]
    %v285 = vld [vmem:[%s3 + $0x478] sm:$0xff]
    %v286 = vld [vmem:[%s3 + $0x480] sm:$0xff]
    %v287 = vld [vmem:[%s3 + $0x488] sm:$0xff]
    %v288 = vld [vmem:[%s3 + $0x490] sm:$0xff]
    %v289 = vld [vmem:[%s3 + $0x498] sm:$0xff]
    %v290 = vld [vmem:[%s3 + $0x4a0] sm:$0xff]
    %v291 = vld [vmem:[%s3 + $0x4a8] sm:$0xff]
    %v292 = vld [vmem:[%s3 + $0x4b0] sm:$0xff]
    %v293 = vld [vmem:[%s3 + $0x4b8] sm:$0xff]
    %v294 = vld [vmem:[%s3 + $0x4c0] sm:$0xff]
    %v295 = vld [vmem:[%s3 + $0x4c8] sm:$0xff]
    %v296 = vld [vmem:[%s3 + $0x4d0] sm:$0xff]
    %v297 = vld [vmem:[%s3 + $0x4d8] sm:$0xff]
    %v298 = vld [vmem:[%s3 + $0x4e0] sm:$0xff]
    %v299 = vld [vmem:[%s3 + $0x4e8] sm:$0xff]
    %v300 = vld [vmem:[%s3 + $0x4f0] sm:$0xff]
    %v301 = vld [vmem:[%s3 + $0x4f8] sm:$0xff]
    %v302 = vld [vmem:[%s3 + $0x500] sm:$0xff]
    %v303 = vld [vmem:[%s3 + $0x508] sm:$0xff]
    %v304 = vld [vmem:[%s3 + $0x510] sm:$0xff]
    %v305 = vld [vmem:[%s3 + $0x518] sm:$0xff]
    %v306 = vld [vmem:[%s3 + $0x520] sm:$0xff]
    %v307 = vld [vmem:[%s3 + $0x528] sm:$0xff]
    %v308 = vld [vmem:[%s3 + $0x530] sm:$0xff]
    %v309 = vld [vmem:[%s3 + $0x538] sm:$0xff]
    %v310 = vld [vmem:[%s3 + $0x540] sm:$0xff]
    %v311 = vld [vmem:[%s3 + $0x548] sm:$0xff]
    %v312 = vld [vmem:[%s3 + $0x550] sm:$0xff]
    %v313 = vld [vmem:[%s3 + $0x558] sm:$0xff]
    %v314 = vld [vmem:[%s3 + $0x560] sm:$0xff]
    %v315 = vld [vmem:[%s3 + $0x568] sm:$0xff]
    %v316 = vld [vmem:[%s3 + $0x570] sm:$0xff]
    %v317 = vld [vmem:[%s3 + $0x578] sm:$0xff]
    %v318 = vld [vmem:[%s3 + $0x580] sm:$0xff]
    %v319 = vld [vmem:[%s3 + $0x588] sm:$0xff]
    %v320 = vld [vmem:[%s3 + $0x590] sm:$0xff]
    %v321 = vld [vmem:[%s3 + $0x598] sm:$0xff]
    %v322 = vld [vmem:[%s3 + $0x5a0] sm:$0xff]
    %v323 = vld [vmem:[%s3 + $0x5a8] sm:$0xff]
    %v324 = vld [vmem:[%s3 + $0x5b0] sm:$0xff]
    %v325 = vld [vmem:[%s3 + $0x5b8] sm:$0xff]
    %v326 = vld [vmem:[%s3 + $0x5c0] sm:$0xff]
    %v327 = vld [vmem:[%s3 + $0x5c8] sm:$0xff]
    %v328 = vld [vmem:[%s3 + $0x5d0] sm:$0xff]
    %v329 = vld [vmem:[%s3 + $0x5d8] sm:$0xff]
    %v330 = vld [vmem:[%s3 + $0x5e0] sm:$0xff]
    %v331 = vld [vmem:[%s3 + $0x5e8] sm:$0xff]
    %v332 = vld [vmem:[%s3 + $0x5f0] sm:$0xff]
    %v333 = vld [vmem:[%s3 + $0x5f8] sm:$0xff]
    %v334 = vld [vmem:[%s3 + $0x600] sm:$0xff]
    %v335 = vld [vmem:[%s3 + $0x608] sm:$0xff]
    %v336 = vld [vmem:[%s3 + $0x610] sm:$0xff]
    %v337 = vld [vmem:[%s3 + $0x618] sm:$0xff]
    %v338 = vld [vmem:[%s3 + $0x620] sm:$0xff]
    %v339 = vld [vmem:[%s3 + $0x628] sm:$0xff]
    %v340 = vld [vmem:[%s3 + $0x630] sm:$0xff]
    %v341 = vld [vmem:[%s3 + $0x638] sm:$0xff]
    %v342 = vld [vmem:[%s3 + $0x640] sm:$0xff]
    %v343 = vld [vmem:[%s3 + $0x648] sm:$0xff]
    %v344 = vld [vmem:[%s3 + $0x650] sm:$0xff]
    %v345 = vld [vmem:[%s3 + $0x658] sm:$0xff]
    %v346 = vld [vmem:[%s3 + $0x660] sm:$0xff]
    %v347 = vld [vmem:[%s3 + $0x668] sm:$0xff]
    %v348 = vld [vmem:[%s3 + $0x670] sm:$0xff]
    %v349 = vld [vmem:[%s3 + $0x678] sm:$0xff]
    %v350 = vld [vmem:[%s3 + $0x680] sm:$0xff]
    %v351 = vld [vmem:[%s3 + $0x688] sm:$0xff]
    %v352 = vld [vmem:[%s3 + $0x690] sm:$0xff]
    %v353 = vld [vmem:[%s3 + $0x698] sm:$0xff]
    %v354 = vld [vmem:[%s3 + $0x6a0] sm:$0xff]
    %v355 = vld [vmem:[%s3 + $0x6a8] sm:$0xff]
    %v356 = vld [vmem:[%s3 + $0x6b0] sm:$0xff]
    %v357 = vld [vmem:[%s3 + $0x6b8] sm:$0xff]
    %v358 = vld [vmem:[%s3 + $0x6c0] sm:$0xff]
    %v359 = vld [vmem:[%s3 + $0x6c8] sm:$0xff]
    %v360 = vld [vmem:[%s3 + $0x6d0] sm:$0xff]
    %v361 = vld [vmem:[%s3 + $0x6d8] sm:$0xff]
    %v362 = vld [vmem:[%s3 + $0x6e0] sm:$0xff]
    %v363 = vld [vmem:[%s3 + $0x6e8] sm:$0xff]
    %v364 = vld [vmem:[%s3 + $0x6f0] sm:$0xff]
    %v365 = vld [vmem:[%s3 + $0x6f8] sm:$0xff]
    %v366 = vld [vmem:[%s3 + $0x700] sm:$0xff]
    %v367 = vld [vmem:[%s3 + $0x708] sm:$0xff]
    %v368 = vld [vmem:[%s3 + $0x710] sm:$0xff]
    %v369 = vld [vmem:[%s3 + $0x718] sm:$0xff]
    %v370 = vld [vmem:[%s3 + $0x720] sm:$0xff]
    %v371 = vld [vmem:[%s3 + $0x728] sm:$0xff]
    %v372 = vld [vmem:[%s3 + $0x730] sm:$0xff]
    %v373 = vld [vmem:[%s3 + $0x738] sm:$0xff]
    %v374 = vld [vmem:[%s3 + $0x740] sm:$0xff]
    %v375 = vld [vmem:[%s3 + $0x748] sm:$0xff]
    %v376 = vld [vmem:[%s3 + $0x750] sm:$0xff]
    %v377 = vld [vmem:[%s3 + $0x758] sm:$0xff]
    %v378 = vld [vmem:[%s3 + $0x760] sm:$0xff]
    %v379 = vld [vmem:[%s3 + $0x768] sm:$0xff]
    %v380 = vld [vmem:[%s3 + $0x770] sm:$0xff]
    %v381 = vld [vmem:[%s3 + $0x778] sm:$0xff]
    %v382 = vld [vmem:[%s3 + $0x780] sm:$0xff]
    %v383 = vld [vmem:[%s3 + $0x788] sm:$0xff]
    %v384 = vld [vmem:[%s3 + $0x790] sm:$0xff]
    %v385 = vld [vmem:[%s3 + $0x798] sm:$0xff]
    %v386 = vld [vmem:[%s3 + $0x7a0] sm:$0xff]
    %v387 = vld [vmem:[%s3 + $0x7a8] sm:$0xff]
    %v388 = vld [vmem:[%s3 + $0x7b0] sm:$0xff]
    %v389 = vld [vmem:[%s3 + $0x7b8] sm:$0xff]
    %v390 = vld [vmem:[%s3 + $0x7c0] sm:$0xff]
    %v391 = vld [vmem:[%s3 + $0x7c8] sm:$0xff]
    %v392 = vld [vmem:[%s3 + $0x7d0] sm:$0xff]
    %v393 = vld [vmem:[%s3 + $0x7d8] sm:$0xff]
    %v394 = vld [vmem:[%s3 + $0x7e0] sm:$0xff]
    %v395 = vld [vmem:[%s3 + $0x7e8] sm:$0xff]
    %v396 = vld [vmem:[%s3 + $0x7f0] sm:$0xff]
    %v397 = vld [vmem:[%s3 + $0x7f8] sm:$0xff]
    %v398 = vld [vmem:[%s3 + $0x800] sm:$0xff]
    %v399 = vld [vmem:[%s3 + $0x808] sm:$0xff]
    %v400 = vld [vmem:[%s3 + $0x810] sm:$0xff]
    %v401 = vld [vmem:[%s3 + $0x818] sm:$0xff]
    %v402 = vld [vmem:[%s3 + $0x820] sm:$0xff]
    %v403 = vld [vmem:[%s3 + $0x828] sm:$0xff]
    %v404 = vld [vmem:[%s3 + $0x830] sm:$0xff]
    %v405 = vld [vmem:[%s3 + $0x838] sm:$0xff]
    %v406 = vld [vmem:[%s3 + $0x840] sm:$0xff]
    %v407 = vld [vmem:[%s3 + $0x848] sm:$0xff]
    %v408 = vld [vmem:[%s3 + $0x850] sm:$0xff]
    %v409 = vld [vmem:[%s3 + $0x858] sm:$0xff]
    %v410 = vld [vmem:[%s3 + $0x860] sm:$0xff]
    %v411 = vld [vmem:[%s3 + $0x868] sm:$0xff]
    %v412 = vld [vmem:[%s3 + $0x870] sm:$0xff]
    %v413 = vld [vmem:[%s3 + $0x878] sm:$0xff]
    %v414 = vld [vmem:[%s3 + $0x880] sm:$0xff]
    %v415 = vld [vmem:[%s3 + $0x888] sm:$0xff]
    %v416 = vld [vmem:[%s3 + $0x890] sm:$0xff]
    %v417 = vld [vmem:[%s3 + $0x898] sm:$0xff]
    %v418 = vld [vmem:[%s3 + $0x8a0] sm:$0xff]
    %v419 = vld [vmem:[%s3 + $0x8a8] sm:$0xff]
    %v420 = vld [vmem:[%s3 + $0x8b0] sm:$0xff]
    %v421 = vld [vmem:[%s3 + $0x8b8] sm:$0xff]
    %v422 = vld [vmem:[%s3 + $0x8c0] sm:$0xff]
    %v423 = vld [vmem:[%s3 + $0x8c8] sm:$0xff]
    %v424 = vld [vmem:[%s3 + $0x8d0] sm:$0xff]
    %v425 = vld [vmem:[%s3 + $0x8d8] sm:$0xff]
    %v426 = vld [vmem:[%s3 + $0x8e0] sm:$0xff]
    %v427 = vld [vmem:[%s3 + $0x8e8] sm:$0xff]
    %v428 = vld [vmem:[%s3 + $0x8f0] sm:$0xff]
    %v429 = vld [vmem:[%s3 + $0x8f8] sm:$0xff]
    %v431 = vlaneseq
    %v432 = vshrl.u32 %v431, 7
    %v433 = vsub.s32 0, %v432
    %v434 = vrot.slane %v27, %v433
    %v435 = vlaneseq
    %v436 = vshrl.u32 %v435, 7
    %v437 = vsub.s32 1, %v436
    %v438 = vrot.slane %v27, %v437
    %v439 = vlaneseq
    %v440 = vshrl.u32 %v439, 7
    %v441 = vsub.s32 2, %v440
    %v442 = vrot.slane %v27, %v441
    %vm458 = vcmask 1041409
    %v459 = vsel %vm458, %v136, %v130
    %v460 = vsel %vm458, %v137, %v131
    %v461 = vsel %vm458, %v138, %v132
    %v462 = vsel %vm458, %v139, %v133
    %v463 = vsel %vm458, %v140, %v134
    %v464 = vsel %vm458, %v141, %v135
    %471 = vmatprep.subr.mxu0 %v188
    %472 = vmatpush1.msra.mxu0 %v187
    %473 = vmatprep.subr.mxu0 %v185
    %474 = vmatpush1.msra.mxu0 %v184
    %475 = vmatprep.subr.mxu0 %v182
    %476 = vmatpush1.msra.mxu0 %v181
    %477 = vmatprep.subr.mxu0 %v179
    %478 = vmatpush1.msra.mxu0 %v178
    %479 = vmatprep.subr.mxu0 %v176
    %480 = vmatpush1.msra.mxu0 %v175
    %481 = vmatprep.subr.mxu0 %v173
    %482 = vmatpush1.msra.mxu0 %v172
    %483 = vmatprep.subr.mxu0 %v170
    %484 = vmatpush1.msra.mxu0 %v169
    %485 = vmatprep.subr.mxu0 %v167
    %486 = vmatpush1.msra.mxu0 %v166
    %487 = vmatprep.subr.mxu0 %v164
    %488 = vmatpush1.msra.mxu0 %v163
    %489 = vmatprep.subr.mxu0 %v161
    %490 = vmatpush1.msra.mxu0 %v160
    %491 = vmatprep.subr.mxu0 %v158
    %492 = vmatpush1.msra.mxu0 %v157
    %493 = vmatprep.subr.mxu0 %v155
    %494 = vmatpush1.msra.mxu0 %v154
    %495 = vmatprep.subr.mxu0 %v152
    %496 = vmatpush1.msra.mxu0 %v151
    %497 = vmatprep.subr.mxu0 %v149
    %498 = vmatpush1.msra.mxu0 %v148
    %499 = vmatprep.subr.mxu0 %v146
    %500 = vmatpush1.msra.mxu0 %v145
    %501 = vmatprep.subr.mxu0 %v143
    %502 = vmatpush1.msra.mxu0 %v142
    %503 = vmatprep.subr.mxu0 %v236
    %504 = vmatpush2.msra.mxu0 %v235
    %505 = vmatprep.subr.mxu0 %v233
    %506 = vmatpush2.msra.mxu0 %v232
    %507 = vmatprep.subr.mxu0 %v230
    %508 = vmatpush2.msra.mxu0 %v229
    %509 = vmatprep.subr.mxu0 %v227
    %510 = vmatpush2.msra.mxu0 %v226
    %511 = vmatprep.subr.mxu0 %v224
    %512 = vmatpush2.msra.mxu0 %v223
    %513 = vmatprep.subr.mxu0 %v221
    %514 = vmatpush2.msra.mxu0 %v220
    %515 = vmatprep.subr.mxu0 %v218
    %516 = vmatpush2.msra.mxu0 %v217
    %517 = vmatprep.subr.mxu0 %v215
    %518 = vmatpush2.msra.mxu0 %v214
    %519 = vmatprep.subr.mxu0 %v212
    %520 = vmatpush2.msra.mxu0 %v211
    %521 = vmatprep.subr.mxu0 %v209
    %522 = vmatpush2.msra.mxu0 %v208
    %523 = vmatprep.subr.mxu0 %v206
    %524 = vmatpush2.msra.mxu0 %v205
    %525 = vmatprep.subr.mxu0 %v203
    %526 = vmatpush2.msra.mxu0 %v202
    %527 = vmatprep.subr.mxu0 %v200
    %528 = vmatpush2.msra.mxu0 %v199
    %529 = vmatprep.subr.mxu0 %v197
    %530 = vmatpush2.msra.mxu0 %v196
    %531 = vmatprep.subr.mxu0 %v194
    %532 = vmatpush2.msra.mxu0 %v193
    %533 = vmatprep.subr.mxu0 %v191
    %534 = vmatpush2.msra.mxu0 %v190
    %535 = vmatprep.mubr.f32.mxu0 %v460
    %536 = vmatmul.mubr.f32.gmra.mxu0 %v459
    %v537 = vpop.f32.mrf.mxu0
    %v538 = vadd.f32 %v434, %v537
    %v539 = vpop.f32.mrf.mxu0
    %v540 = vadd.f32 %v438, %v539
    %541 = vdwg.mxu0
    %542 = vmatprep.subr.mxu0 %v284
    %543 = vmatpush1.msra.mxu0 %v283
    %544 = vmatprep.subr.mxu0 %v281
    %545 = vmatpush1.msra.mxu0 %v280
    %546 = vmatprep.subr.mxu0 %v278
    %547 = vmatpush1.msra.mxu0 %v277
    %548 = vmatprep.subr.mxu0 %v275
    %549 = vmatpush1.msra.mxu0 %v274
    %550 = vmatprep.subr.mxu0 %v272
    %551 = vmatpush1.msra.mxu0 %v271
    %552 = vmatprep.subr.mxu0 %v269
    %553 = vmatpush1.msra.mxu0 %v268
    %554 = vmatprep.subr.mxu0 %v266
    %555 = vmatpush1.msra.mxu0 %v265
    %556 = vmatprep.subr.mxu0 %v263
    %557 = vmatpush1.msra.mxu0 %v262
    %558 = vmatprep.subr.mxu0 %v260
    %559 = vmatpush1.msra.mxu0 %v259
    %560 = vmatprep.subr.mxu0 %v257
    %561 = vmatpush1.msra.mxu0 %v256
    %562 = vmatprep.subr.mxu0 %v254
    %563 = vmatpush1.msra.mxu0 %v253
    %564 = vmatprep.subr.mxu0 %v251
    %565 = vmatpush1.msra.mxu0 %v250
    %566 = vmatprep.subr.mxu0 %v248
    %567 = vmatpush1.msra.mxu0 %v247
    %568 = vmatprep.subr.mxu0 %v245
    %569 = vmatpush1.msra.mxu0 %v244
    %570 = vmatprep.subr.mxu0 %v242
    %571 = vmatpush1.msra.mxu0 %v241
    %572 = vmatprep.subr.mxu0 %v239
    %573 = vmatpush1.msra.mxu0 %v238
    %574 = vmatprep.subr.mxu0 %v332
    %575 = vmatpush2.msra.mxu0 %v331
    %576 = vmatprep.subr.mxu0 %v329
    %577 = vmatpush2.msra.mxu0 %v328
    %578 = vmatprep.subr.mxu0 %v326
    %579 = vmatpush2.msra.mxu0 %v325
    %580 = vmatprep.subr.mxu0 %v323
    %581 = vmatpush2.msra.mxu0 %v322
    %582 = vmatprep.subr.mxu0 %v320
    %583 = vmatpush2.msra.mxu0 %v319
    %584 = vmatprep.subr.mxu0 %v317
    %585 = vmatpush2.msra.mxu0 %v316
    %586 = vmatprep.subr.mxu0 %v314
    %587 = vmatpush2.msra.mxu0 %v313
    %588 = vmatprep.subr.mxu0 %v311
    %589 = vmatpush2.msra.mxu0 %v310
    %590 = vmatprep.subr.mxu0 %v308
    %591 = vmatpush2.msra.mxu0 %v307
    %592 = vmatprep.subr.mxu0 %v305
    %593 = vmatpush2.msra.mxu0 %v304
    %594 = vmatprep.subr.mxu0 %v302
    %595 = vmatpush2.msra.mxu0 %v301
    %596 = vmatprep.subr.mxu0 %v299
    %597 = vmatpush2.msra.mxu0 %v298
    %598 = vmatprep.subr.mxu0 %v296
    %599 = vmatpush2.msra.mxu0 %v295
    %600 = vmatprep.subr.mxu0 %v293
    %601 = vmatpush2.msra.mxu0 %v292
    %602 = vmatprep.subr.mxu0 %v290
    %603 = vmatpush2.msra.mxu0 %v289
    %604 = vmatprep.subr.mxu0 %v287
    %605 = vmatpush2.msra.mxu0 %v286
    %606 = vmatprep.mubr.f32.mxu0 %v462
    %607 = vmatmul.mubr.f32.gmra.mxu0 %v461
    %v608 = vpop.f32.mrf.mxu0
    %v609 = vadd.f32 %v538, %v608
    %v610 = vpop.f32.mrf.mxu0
    %v611 = vadd.f32 %v540, %v610
    %612 = vdwg.mxu0
    %613 = vmatprep.subr.mxu0 %v380
    %614 = vmatpush1.msra.mxu0 %v379
    %615 = vmatprep.subr.mxu0 %v377
    %616 = vmatpush1.msra.mxu0 %v376
    %617 = vmatprep.subr.mxu0 %v374
    %618 = vmatpush1.msra.mxu0 %v373
    %619 = vmatprep.subr.mxu0 %v371
    %620 = vmatpush1.msra.mxu0 %v370
    %621 = vmatprep.subr.mxu0 %v368
    %622 = vmatpush1.msra.mxu0 %v367
    %623 = vmatprep.subr.mxu0 %v365
    %624 = vmatpush1.msra.mxu0 %v364
    %625 = vmatprep.subr.mxu0 %v362
    %626 = vmatpush1.msra.mxu0 %v361
    %627 = vmatprep.subr.mxu0 %v359
    %628 = vmatpush1.msra.mxu0 %v358
    %629 = vmatprep.subr.mxu0 %v356
    %630 = vmatpush1.msra.mxu0 %v355
    %631 = vmatprep.subr.mxu0 %v353
    %632 = vmatpush1.msra.mxu0 %v352
    %633 = vmatprep.subr.mxu0 %v350
    %634 = vmatpush1.msra.mxu0 %v349
    %635 = vmatprep.subr.mxu0 %v347
    %636 = vmatpush1.msra.mxu0 %v346
    %637 = vmatprep.subr.mxu0 %v344
    %638 = vmatpush1.msra.mxu0 %v343
    %639 = vmatprep.subr.mxu0 %v341
    %640 = vmatpush1.msra.mxu0 %v340
    %641 = vmatprep.subr.mxu0 %v338
    %642 = vmatpush1.msra.mxu0 %v337
    %643 = vmatprep.subr.mxu0 %v335
    %644 = vmatpush1.msra.mxu0 %v334
    %645 = vmatprep.subr.mxu0 %v428
    %646 = vmatpush2.msra.mxu0 %v427
    %647 = vmatprep.subr.mxu0 %v425
    %648 = vmatpush2.msra.mxu0 %v424
    %649 = vmatprep.subr.mxu0 %v422
    %650 = vmatpush2.msra.mxu0 %v421
    %651 = vmatprep.subr.mxu0 %v419
    %652 = vmatpush2.msra.mxu0 %v418
    %653 = vmatprep.subr.mxu0 %v416
    %654 = vmatpush2.msra.mxu0 %v415
    %655 = vmatprep.subr.mxu0 %v413
    %656 = vmatpush2.msra.mxu0 %v412
    %657 = vmatprep.subr.mxu0 %v410
    %658 = vmatpush2.msra.mxu0 %v409
    %659 = vmatprep.subr.mxu0 %v407
    %660 = vmatpush2.msra.mxu0 %v406
    %661 = vmatprep.subr.mxu0 %v404
    %662 = vmatpush2.msra.mxu0 %v403
    %663 = vmatprep.subr.mxu0 %v401
    %664 = vmatpush2.msra.mxu0 %v400
    %665 = vmatprep.subr.mxu0 %v398
    %666 = vmatpush2.msra.mxu0 %v397
    %667 = vmatprep.subr.mxu0 %v395
    %668 = vmatpush2.msra.mxu0 %v394
    %669 = vmatprep.subr.mxu0 %v392
    %670 = vmatpush2.msra.mxu0 %v391
    %671 = vmatprep.subr.mxu0 %v389
    %672 = vmatpush2.msra.mxu0 %v388
    %673 = vmatprep.subr.mxu0 %v386
    %674 = vmatpush2.msra.mxu0 %v385
    %675 = vmatprep.subr.mxu0 %v383
    %676 = vmatpush2.msra.mxu0 %v382
    %677 = vmatprep.mubr.f32.mxu0 %v464
    %678 = vmatmul.mubr.f32.gmra.mxu0 %v463
    %v679 = vpop.f32.mrf.mxu0
    %v680 = vadd.f32 %v609, %v679
    %v681 = vpop.f32.mrf.mxu0
    %v682 = vadd.f32 %v611, %v681
    %683 = vdwg.mxu0
    %684 = vmatprep.subr.mxu0 0.0
    %685 = vmatpush1.msra.mxu0 %v189
    %686 = vmatprep.subr.mxu0 0.0
    %687 = vmatpush1.msra.mxu0 %v186
    %688 = vmatprep.subr.mxu0 0.0
    %689 = vmatpush1.msra.mxu0 %v183
    %690 = vmatprep.subr.mxu0 0.0
    %691 = vmatpush1.msra.mxu0 %v180
    %692 = vmatprep.subr.mxu0 0.0
    %693 = vmatpush1.msra.mxu0 %v177
    %694 = vmatprep.subr.mxu0 0.0
    %695 = vmatpush1.msra.mxu0 %v174
    %696 = vmatprep.subr.mxu0 0.0
    %697 = vmatpush1.msra.mxu0 %v171
    %698 = vmatprep.subr.mxu0 0.0
    %699 = vmatpush1.msra.mxu0 %v168
    %700 = vmatprep.subr.mxu0 0.0
    %701 = vmatpush1.msra.mxu0 %v165
    %702 = vmatprep.subr.mxu0 0.0
    %703 = vmatpush1.msra.mxu0 %v162
    %704 = vmatprep.subr.mxu0 0.0
    %705 = vmatpush1.msra.mxu0 %v159
    %706 = vmatprep.subr.mxu0 0.0
    %707 = vmatpush1.msra.mxu0 %v156
    %708 = vmatprep.subr.mxu0 0.0
    %709 = vmatpush1.msra.mxu0 %v153
    %710 = vmatprep.subr.mxu0 0.0
    %711 = vmatpush1.msra.mxu0 %v150
    %712 = vmatprep.subr.mxu0 0.0
    %713 = vmatpush1.msra.mxu0 %v147
    %714 = vmatprep.subr.mxu0 0.0
    %715 = vmatpush1.msra.mxu0 %v144
    %716 = vmatprep.subr.mxu0 0.0
    %717 = vmatpush2.msra.mxu0 %v237
    %718 = vmatprep.subr.mxu0 0.0
    %719 = vmatpush2.msra.mxu0 %v234
    %720 = vmatprep.subr.mxu0 0.0
    %721 = vmatpush2.msra.mxu0 %v231
    %722 = vmatprep.subr.mxu0 0.0
    %723 = vmatpush2.msra.mxu0 %v228
    %724 = vmatprep.subr.mxu0 0.0
    %725 = vmatpush2.msra.mxu0 %v225
    %726 = vmatprep.subr.mxu0 0.0
    %727 = vmatpush2.msra.mxu0 %v222
    %728 = vmatprep.subr.mxu0 0.0
    %729 = vmatpush2.msra.mxu0 %v219
    %730 = vmatprep.subr.mxu0 0.0
    %731 = vmatpush2.msra.mxu0 %v216
    %732 = vmatprep.subr.mxu0 0.0
    %733 = vmatpush2.msra.mxu0 %v213
    %734 = vmatprep.subr.mxu0 0.0
    %735 = vmatpush2.msra.mxu0 %v210
    %736 = vmatprep.subr.mxu0 0.0
    %737 = vmatpush2.msra.mxu0 %v207
    %738 = vmatprep.subr.mxu0 0.0
    %739 = vmatpush2.msra.mxu0 %v204
    %740 = vmatprep.subr.mxu0 0.0
    %741 = vmatpush2.msra.mxu0 %v201
    %742 = vmatprep.subr.mxu0 0.0
    %743 = vmatpush2.msra.mxu0 %v198
    %744 = vmatprep.subr.mxu0 0.0
    %745 = vmatpush2.msra.mxu0 %v195
    %746 = vmatprep.subr.mxu0 0.0
    %747 = vmatpush2.msra.mxu0 %v192
    %748 = vmatprep.mubr.f32.mxu0 %v460
    %749 = vmatmul.mubr.f32.gmra.mxu0 %v459
    %v750 = vpop.f32.mrf.mxu0
    %v751 = vadd.f32 %v442, %v750
    %v752 = vpop.f32.mrf.mxu0
    %753 = vdwg.mxu0
    %754 = vmatprep.subr.mxu0 0.0
    %755 = vmatpush1.msra.mxu0 %v285
    %756 = vmatprep.subr.mxu0 0.0
    %757 = vmatpush1.msra.mxu0 %v282
    %758 = vmatprep.subr.mxu0 0.0
    %759 = vmatpush1.msra.mxu0 %v279
    %760 = vmatprep.subr.mxu0 0.0
    %761 = vmatpush1.msra.mxu0 %v276
    %762 = vmatprep.subr.mxu0 0.0
    %763 = vmatpush1.msra.mxu0 %v273
    %764 = vmatprep.subr.mxu0 0.0
    %765 = vmatpush1.msra.mxu0 %v270
    %766 = vmatprep.subr.mxu0 0.0
    %767 = vmatpush1.msra.mxu0 %v267
    %768 = vmatprep.subr.mxu0 0.0
    %769 = vmatpush1.msra.mxu0 %v264
    %770 = vmatprep.subr.mxu0 0.0
    %771 = vmatpush1.msra.mxu0 %v261
    %772 = vmatprep.subr.mxu0 0.0
    %773 = vmatpush1.msra.mxu0 %v258
    %774 = vmatprep.subr.mxu0 0.0
    %775 = vmatpush1.msra.mxu0 %v255
    %776 = vmatprep.subr.mxu0 0.0
    %777 = vmatpush1.msra.mxu0 %v252
    %778 = vmatprep.subr.mxu0 0.0
    %779 = vmatpush1.msra.mxu0 %v249
    %780 = vmatprep.subr.mxu0 0.0
    %781 = vmatpush1.msra.mxu0 %v246
    %782 = vmatprep.subr.mxu0 0.0
    %783 = vmatpush1.msra.mxu0 %v243
    %784 = vmatprep.subr.mxu0 0.0
    %785 = vmatpush1.msra.mxu0 %v240
    %786 = vmatprep.subr.mxu0 0.0
    %787 = vmatpush2.msra.mxu0 %v333
    %788 = vmatprep.subr.mxu0 0.0
    %789 = vmatpush2.msra.mxu0 %v330
    %790 = vmatprep.subr.mxu0 0.0
    %791 = vmatpush2.msra.mxu0 %v327
    %792 = vmatprep.subr.mxu0 0.0
    %793 = vmatpush2.msra.mxu0 %v324
    %794 = vmatprep.subr.mxu0 0.0
    %795 = vmatpush2.msra.mxu0 %v321
    %796 = vmatprep.subr.mxu0 0.0
    %797 = vmatpush2.msra.mxu0 %v318
    %798 = vmatprep.subr.mxu0 0.0
    %799 = vmatpush2.msra.mxu0 %v315
    %800 = vmatprep.subr.mxu0 0.0
    %801 = vmatpush2.msra.mxu0 %v312
    %802 = vmatprep.subr.mxu0 0.0
    %803 = vmatpush2.msra.mxu0 %v309
    %804 = vmatprep.subr.mxu0 0.0
    %805 = vmatpush2.msra.mxu0 %v306
    %806 = vmatprep.subr.mxu0 0.0
    %807 = vmatpush2.msra.mxu0 %v303
    %808 = vmatprep.subr.mxu0 0.0
    %809 = vmatpush2.msra.mxu0 %v300
    %810 = vmatprep.subr.mxu0 0.0
    %811 = vmatpush2.msra.mxu0 %v297
    %812 = vmatprep.subr.mxu0 0.0
    %813 = vmatpush2.msra.mxu0 %v294
    %814 = vmatprep.subr.mxu0 0.0
    %815 = vmatpush2.msra.mxu0 %v291
    %816 = vmatprep.subr.mxu0 0.0
    %817 = vmatpush2.msra.mxu0 %v288
    %818 = vmatprep.mubr.f32.mxu0 %v462
    %819 = vmatmul.mubr.f32.gmra.mxu0 %v461
    %v820 = vpop.f32.mrf.mxu0
    %v821 = vadd.f32 %v751, %v820
    %v822 = vpop.f32.mrf.mxu0
    %823 = vdwg.mxu0
    %824 = vmatprep.subr.mxu0 0.0
    %825 = vmatpush1.msra.mxu0 %v381
    %826 = vmatprep.subr.mxu0 0.0
    %827 = vmatpush1.msra.mxu0 %v378
    %828 = vmatprep.subr.mxu0 0.0
    %829 = vmatpush1.msra.mxu0 %v375
    %830 = vmatprep.subr.mxu0 0.0
    %831 = vmatpush1.msra.mxu0 %v372
    %832 = vmatprep.subr.mxu0 0.0
    %833 = vmatpush1.msra.mxu0 %v369
    %834 = vmatprep.subr.mxu0 0.0
    %835 = vmatpush1.msra.mxu0 %v366
    %836 = vmatprep.subr.mxu0 0.0
    %837 = vmatpush1.msra.mxu0 %v363
    %838 = vmatprep.subr.mxu0 0.0
    %839 = vmatpush1.msra.mxu0 %v360
    %840 = vmatprep.subr.mxu0 0.0
    %841 = vmatpush1.msra.mxu0 %v357
    %842 = vmatprep.subr.mxu0 0.0
    %843 = vmatpush1.msra.mxu0 %v354
    %844 = vmatprep.subr.mxu0 0.0
    %845 = vmatpush1.msra.mxu0 %v351
    %846 = vmatprep.subr.mxu0 0.0
    %847 = vmatpush1.msra.mxu0 %v348
    %848 = vmatprep.subr.mxu0 0.0
    %849 = vmatpush1.msra.mxu0 %v345
    %850 = vmatprep.subr.mxu0 0.0
    %851 = vmatpush1.msra.mxu0 %v342
    %852 = vmatprep.subr.mxu0 0.0
    %853 = vmatpush1.msra.mxu0 %v339
    %854 = vmatprep.subr.mxu0 0.0
    %855 = vmatpush1.msra.mxu0 %v336
    %856 = vmatprep.subr.mxu0 0.0
    %857 = vmatpush2.msra.mxu0 %v429
    %858 = vmatprep.subr.mxu0 0.0
    %859 = vmatpush2.msra.mxu0 %v426
    %860 = vmatprep.subr.mxu0 0.0
    %861 = vmatpush2.msra.mxu0 %v423
    %862 = vmatprep.subr.mxu0 0.0
    %863 = vmatpush2.msra.mxu0 %v420
    %864 = vmatprep.subr.mxu0 0.0
    %865 = vmatpush2.msra.mxu0 %v417
    %866 = vmatprep.subr.mxu0 0.0
    %867 = vmatpush2.msra.mxu0 %v414
    %868 = vmatprep.subr.mxu0 0.0
    %869 = vmatpush2.msra.mxu0 %v411
    %870 = vmatprep.subr.mxu0 0.0
    %871 = vmatpush2.msra.mxu0 %v408
    %872 = vmatprep.subr.mxu0 0.0
    %873 = vmatpush2.msra.mxu0 %v405
    %874 = vmatprep.subr.mxu0 0.0
    %875 = vmatpush2.msra.mxu0 %v402
    %876 = vmatprep.subr.mxu0 0.0
    %877 = vmatpush2.msra.mxu0 %v399
    %878 = vmatprep.subr.mxu0 0.0
    %879 = vmatpush2.msra.mxu0 %v396
    %880 = vmatprep.subr.mxu0 0.0
    %881 = vmatpush2.msra.mxu0 %v393
    %882 = vmatprep.subr.mxu0 0.0
    %883 = vmatpush2.msra.mxu0 %v390
    %884 = vmatprep.subr.mxu0 0.0
    %885 = vmatpush2.msra.mxu0 %v387
    %886 = vmatprep.subr.mxu0 0.0
    %887 = vmatpush2.msra.mxu0 %v384
    %888 = vmatprep.mubr.f32.mxu0 %v464
    %889 = vmatmul.mubr.f32.gmra.mxu0 %v463
    %v890 = vpop.f32.mrf.mxu0
    %v891 = vadd.f32 %v821, %v890
    %v892 = vpop.f32.mrf.mxu0
    %893 = vdwg.mxu0
    %v894 = vld [vmem:[%s4] sm:$0xff]
    %v895 = vld [vmem:[%s4 + $0x8] sm:$0xff]
    %v896 = vld [vmem:[%s4 + $0x10] sm:$0xff]
    %v897 = vld [vmem:[%s4 + $0x18] sm:$0xff]
    %v898 = vld [vmem:[%s4 + $0x20] sm:$0xff]
    %v899 = vld [vmem:[%s4 + $0x28] sm:$0xff]
    %v900 = vld [vmem:[%s4 + $0x30] sm:$0xff]
    %v901 = vld [vmem:[%s4 + $0x38] sm:$0xff]
    %v902 = vld [vmem:[%s4 + $0x40] sm:$0xff]
    %v903 = vld [vmem:[%s4 + $0x48] sm:$0xff]
    %v904 = vld [vmem:[%s4 + $0x50] sm:$0xff]
    %v905 = vld [vmem:[%s4 + $0x58] sm:$0xff]
    %v906 = vld [vmem:[%s4 + $0x60] sm:$0xff]
    %v907 = vld [vmem:[%s4 + $0x68] sm:$0xff]
    %v908 = vld [vmem:[%s4 + $0x70] sm:$0xff]
    %v909 = vld [vmem:[%s4 + $0x78] sm:$0xff]
    %v910 = vld [vmem:[%s4 + $0x80] sm:$0xff]
    %v911 = vld [vmem:[%s4 + $0x88] sm:$0xff]
    %v912 = vld [vmem:[%s4 + $0x90] sm:$0xff]
    %v913 = vld [vmem:[%s4 + $0x98] sm:$0xff]
    %v914 = vld [vmem:[%s4 + $0xa0] sm:$0xff]
    %v915 = vld [vmem:[%s4 + $0xa8] sm:$0xff]
    %v916 = vld [vmem:[%s4 + $0xb0] sm:$0xff]
    %v917 = vld [vmem:[%s4 + $0xb8] sm:$0xff]
    %v918 = vld [vmem:[%s4 + $0xc0] sm:$0xff]
    %v919 = vld [vmem:[%s4 + $0xc8] sm:$0xff]
    %v920 = vld [vmem:[%s4 + $0xd0] sm:$0xff]
    %v921 = vld [vmem:[%s4 + $0xd8] sm:$0xff]
    %v922 = vld [vmem:[%s4 + $0xe0] sm:$0xff]
    %v923 = vld [vmem:[%s4 + $0xe8] sm:$0xff]
    %v924 = vld [vmem:[%s4 + $0xf0] sm:$0xff]
    %v925 = vld [vmem:[%s4 + $0xf8] sm:$0xff]
    %v926 = vld [vmem:[%s4 + $0x100] sm:$0xff]
    %v927 = vld [vmem:[%s4 + $0x108] sm:$0xff]
    %v928 = vld [vmem:[%s4 + $0x110] sm:$0xff]
    %v929 = vld [vmem:[%s4 + $0x118] sm:$0xff]
    %v930 = vld [vmem:[%s4 + $0x120] sm:$0xff]
    %v931 = vld [vmem:[%s4 + $0x128] sm:$0xf]
    %vm932 = vcmask 359424
    %v934 = vsel %vm932, %v891, 0
    %vm936 = vcmask 1043456
    %v938 = vsel %vm936, %v931, 0
    %940 = vmatprep.subr.mxu0 0.0
    %941 = vmatpush1.msra.mxu0 %v909
    %942 = vmatprep.subr.mxu0 0.0
    %943 = vmatpush1.msra.mxu0 %v908
    %944 = vmatprep.subr.mxu0 0.0
    %945 = vmatpush1.msra.mxu0 %v907
    %946 = vmatprep.subr.mxu0 0.0
    %947 = vmatpush1.msra.mxu0 %v906
    %948 = vmatprep.subr.mxu0 0.0
    %949 = vmatpush1.msra.mxu0 %v905
    %950 = vmatprep.subr.mxu0 0.0
    %951 = vmatpush1.msra.mxu0 %v904
    %952 = vmatprep.subr.mxu0 0.0
    %953 = vmatpush1.msra.mxu0 %v903
    %954 = vmatprep.subr.mxu0 0.0
    %955 = vmatpush1.msra.mxu0 %v902
    %956 = vmatprep.subr.mxu0 0.0
    %957 = vmatpush1.msra.mxu0 %v901
    %958 = vmatprep.subr.mxu0 0.0
    %959 = vmatpush1.msra.mxu0 %v900
    %960 = vmatprep.subr.mxu0 0.0
    %961 = vmatpush1.msra.mxu0 %v899
    %962 = vmatprep.subr.mxu0 0.0
    %963 = vmatpush1.msra.mxu0 %v898
    %964 = vmatprep.subr.mxu0 0.0
    %965 = vmatpush1.msra.mxu0 %v897
    %966 = vmatprep.subr.mxu0 0.0
    %967 = vmatpush1.msra.mxu0 %v896
    %968 = vmatprep.subr.mxu0 0.0
    %969 = vmatpush1.msra.mxu0 %v895
    %970 = vmatprep.subr.mxu0 0.0
    %971 = vmatpush1.msra.mxu0 %v894
    %972 = vmatprep.subr.mxu0 0.0
    %973 = vmatpush2.msra.mxu0 %v925
    %974 = vmatprep.subr.mxu0 0.0
    %975 = vmatpush2.msra.mxu0 %v924
    %976 = vmatprep.subr.mxu0 0.0
    %977 = vmatpush2.msra.mxu0 %v923
    %978 = vmatprep.subr.mxu0 0.0
    %979 = vmatpush2.msra.mxu0 %v922
    %980 = vmatprep.subr.mxu0 0.0
    %981 = vmatpush2.msra.mxu0 %v921
    %982 = vmatprep.subr.mxu0 0.0
    %983 = vmatpush2.msra.mxu0 %v920
    %984 = vmatprep.subr.mxu0 0.0
    %985 = vmatpush2.msra.mxu0 %v919
    %986 = vmatprep.subr.mxu0 0.0
    %987 = vmatpush2.msra.mxu0 %v918
    %988 = vmatprep.subr.mxu0 0.0
    %989 = vmatpush2.msra.mxu0 %v917
    %990 = vmatprep.subr.mxu0 0.0
    %991 = vmatpush2.msra.mxu0 %v916
    %992 = vmatprep.subr.mxu0 0.0
    %993 = vmatpush2.msra.mxu0 %v915
    %994 = vmatprep.subr.mxu0 0.0
    %995 = vmatpush2.msra.mxu0 %v914
    %996 = vmatprep.subr.mxu0 0.0
    %997 = vmatpush2.msra.mxu0 %v913
    %998 = vmatprep.subr.mxu0 0.0
    %999 = vmatpush2.msra.mxu0 %v912
    %1000 = vmatprep.subr.mxu0 0.0
    %1001 = vmatpush2.msra.mxu0 %v911
    %1002 = vmatprep.subr.mxu0 0.0
    %1003 = vmatpush2.msra.mxu0 %v910
    %1004 = vmatprep.mubr.f32.mxu0 %v682
    %1005 = vmatmul.mubr.f32.gmra.mxu0 %v680
    %v1006 = vpop.f32.mrf.mxu0
    %v1007 = vadd.f32 %v28, %v1006
    %v1008 = vpop.f32.mrf.mxu0
    %1009 = vdwg.mxu0
    %1010 = vmatprep.subr.mxu0 0.0
    %1011 = vmatpush1.msra.mxu0 0.0
    %1012 = vmatprep.subr.mxu0 0.0
    %1013 = vmatpush1.msra.mxu0 0.0
    %1014 = vmatprep.subr.mxu0 0.0
    %1015 = vmatpush1.msra.mxu0 0.0
    %1016 = vmatprep.subr.mxu0 0.0
    %1017 = vmatpush1.msra.mxu0 0.0
    %1018 = vmatprep.subr.mxu0 0.0
    %1019 = vmatpush1.msra.mxu0 0.0
    %1020 = vmatprep.subr.mxu0 0.0
    %1021 = vmatpush1.msra.mxu0 0.0
    %1022 = vmatprep.subr.mxu0 0.0
    %1023 = vmatpush1.msra.mxu0 0.0
    %1024 = vmatprep.subr.mxu0 0.0
    %1025 = vmatpush1.msra.mxu0 0.0
    %1026 = vmatprep.subr.mxu0 0.0
    %1027 = vmatpush1.msra.mxu0 0.0
    %1028 = vmatprep.subr.mxu0 0.0
    %1029 = vmatpush1.msra.mxu0 0.0
    %1030 = vmatprep.subr.mxu0 0.0
    %1031 = vmatpush1.msra.mxu0 %v938
    %1032 = vmatprep.subr.mxu0 0.0
    %1033 = vmatpush1.msra.mxu0 %v930
    %1034 = vmatprep.subr.mxu0 0.0
    %1035 = vmatpush1.msra.mxu0 %v929
    %1036 = vmatprep.subr.mxu0 0.0
    %1037 = vmatpush1.msra.mxu0 %v928
    %1038 = vmatprep.subr.mxu0 0.0
    %1039 = vmatpush1.msra.mxu0 %v927
    %1040 = vmatprep.subr.mxu0 0.0
    %1041 = vmatpush1.msra.mxu0 %v926
    %1042 = vmatprep.subr.mxu0 0.0
    %1043 = vmatpush2.msra.mxu0 0.0
    %1044 = vmatprep.subr.mxu0 0.0
    %1045 = vmatpush2.msra.mxu0 0.0
    %1046 = vmatprep.subr.mxu0 0.0
    %1047 = vmatpush2.msra.mxu0 0.0
    %1048 = vmatprep.subr.mxu0 0.0
    %1049 = vmatpush2.msra.mxu0 0.0
    %1050 = vmatprep.subr.mxu0 0.0
    %1051 = vmatpush2.msra.mxu0 0.0
    %1052 = vmatprep.subr.mxu0 0.0
    %1053 = vmatpush2.msra.mxu0 0.0
    %1054 = vmatprep.subr.mxu0 0.0
    %1055 = vmatpush2.msra.mxu0 0.0
    %1056 = vmatprep.subr.mxu0 0.0
    %1057 = vmatpush2.msra.mxu0 0.0
    %1058 = vmatprep.subr.mxu0 0.0
    %1059 = vmatpush2.msra.mxu0 0.0
    %1060 = vmatprep.subr.mxu0 0.0
    %1061 = vmatpush2.msra.mxu0 0.0
    %1062 = vmatprep.subr.mxu0 0.0
    %1063 = vmatpush2.msra.mxu0 0.0
    %1064 = vmatprep.subr.mxu0 0.0
    %1065 = vmatpush2.msra.mxu0 0.0
    %1066 = vmatprep.subr.mxu0 0.0
    %1067 = vmatpush2.msra.mxu0 0.0
    %1068 = vmatprep.subr.mxu0 0.0
    %1069 = vmatpush2.msra.mxu0 0.0
    %1070 = vmatprep.subr.mxu0 0.0
    %1071 = vmatpush2.msra.mxu0 0.0
    %1072 = vmatprep.subr.mxu0 0.0
    %1073 = vmatpush2.msra.mxu0 0.0
    %1074 = vmatprep.mubr.f32.mxu0 0.0
    %1075 = vmatmul.mubr.f32.gmra.mxu0 %v934
    %v1076 = vpop.f32.mrf.mxu0
    %v1077 = vadd.f32 %v1007, %v1076
    %v1078 = vpop.f32.mrf.mxu0
    %1079 = vdwg.mxu0
    %v1080 = vld [vmem:[%s1] sm:$0xff]
    %v1081 = vld [vmem:[%s1 + $0x8] sm:$0xff]
    %v1082 = vld [vmem:[%s1 + $0x10] sm:$0xff]
    %v1083 = vld [vmem:[%s1 + $0x18] sm:$0xff]
    %v1084 = vld [vmem:[%s1 + $0x20] sm:$0xff]
    %v1085 = vld [vmem:[%s1 + $0x28] sm:$0xff]
    %v1086 = vld [vmem:[%s1 + $0x30] sm:$0xff]
    %v1087 = vld [vmem:[%s1 + $0x38] sm:$0xff]
    %v1088 = vld [vmem:[%s1 + $0x40] sm:$0xff]
    %v1089 = vld [vmem:[%s1 + $0x48] sm:$0xff]
    %v1090 = vld [vmem:[%s1 + $0x50] sm:$0xff]
    %v1091 = vld [vmem:[%s1 + $0x58] sm:$0xff]
    %v1092 = vld [vmem:[%s2] sm:$0xff]
    %v1093 = vld [vmem:[%s2 + $0x8] sm:$0xff]
    %v1094 = vld [vmem:[%s2 + $0x10] sm:$0xff]
    %v1095 = vld [vmem:[%s2 + $0x18] sm:$0xff]
    %v1096 = vld [vmem:[%s2 + $0x20] sm:$0xff]
    %v1097 = vld [vmem:[%s2 + $0x28] sm:$0xff]
    %v1098 = vld [vmem:[%s2 + $0x30] sm:$0xff]
    %v1099 = vld [vmem:[%s2 + $0x38] sm:$0xff]
    %v1100 = vld [vmem:[%s2 + $0x40] sm:$0xff]
    %v1101 = vld [vmem:[%s2 + $0x48] sm:$0xff]
    %v1102 = vld [vmem:[%s2 + $0x50] sm:$0xff]
    %v1103 = vld [vmem:[%s2 + $0x58] sm:$0xff]
    %v1104 = vld [vmem:[%s2 + $0x60] sm:$0xff]
    %v1105 = vld [vmem:[%s2 + $0x68] sm:$0xff]
    %v1106 = vld [vmem:[%s2 + $0x70] sm:$0xff]
    %v1107 = vld [vmem:[%s2 + $0x78] sm:$0xff]
    %v1108 = vld [vmem:[%s2 + $0x80] sm:$0xff]
    %v1109 = vld [vmem:[%s2 + $0x88] sm:$0xff]
    %v1110 = vld [vmem:[%s2 + $0x90] sm:$0xff]
    %v1111 = vld [vmem:[%s2 + $0x98] sm:$0xff]
    %v1112 = vld [vmem:[%s2 + $0xa0] sm:$0xff]
    %v1113 = vld [vmem:[%s2 + $0xa8] sm:$0xff]
    %v1114 = vld [vmem:[%s2 + $0xb0] sm:$0xff]
    %v1115 = vld [vmem:[%s2 + $0xb8] sm:$0xff]
    %v1116 = vld [vmem:[%s2 + $0xc0] sm:$0xff]
    %v1117 = vld [vmem:[%s2 + $0xc8] sm:$0xff]
    %v1118 = vld [vmem:[%s2 + $0xd0] sm:$0xff]
    %v1119 = vld [vmem:[%s2 + $0xd8] sm:$0xff]
    %v1120 = vld [vmem:[%s2 + $0xe0] sm:$0xff]
    %v1121 = vld [vmem:[%s2 + $0xe8] sm:$0xff]
    %v1122 = vld [vmem:[%s2 + $0xf0] sm:$0xff]
    %v1123 = vld [vmem:[%s2 + $0xf8] sm:$0xff]
    %v1124 = vld [vmem:[%s2 + $0x100] sm:$0xff]
    %v1125 = vld [vmem:[%s2 + $0x108] sm:$0xff]
    %v1126 = vld [vmem:[%s2 + $0x110] sm:$0xff]
    %v1127 = vld [vmem:[%s2 + $0x118] sm:$0xff]
    %v1128 = vld [vmem:[%s2 + $0x120] sm:$0xff]
    %v1129 = vld [vmem:[%s2 + $0x128] sm:$0xff]
    %v1130 = vld [vmem:[%s2 + $0x130] sm:$0xff]
    %v1131 = vld [vmem:[%s2 + $0x138] sm:$0xff]
    %v1132 = vld [vmem:[%s2 + $0x140] sm:$0xff]
    %v1133 = vld [vmem:[%s2 + $0x148] sm:$0xff]
    %v1134 = vld [vmem:[%s2 + $0x150] sm:$0xff]
    %v1135 = vld [vmem:[%s2 + $0x158] sm:$0xff]
    %v1136 = vld [vmem:[%s2 + $0x160] sm:$0xff]
    %v1137 = vld [vmem:[%s2 + $0x168] sm:$0xff]
    %v1138 = vld [vmem:[%s2 + $0x170] sm:$0xff]
    %v1139 = vld [vmem:[%s2 + $0x178] sm:$0xff]
    %v1140 = vld [vmem:[%s2 + $0x180] sm:$0xff]
    %v1141 = vld [vmem:[%s2 + $0x188] sm:$0xff]
    %v1142 = vld [vmem:[%s2 + $0x190] sm:$0xff]
    %v1143 = vld [vmem:[%s2 + $0x198] sm:$0xff]
    %v1144 = vld [vmem:[%s2 + $0x1a0] sm:$0xff]
    %v1145 = vld [vmem:[%s2 + $0x1a8] sm:$0xff]
    %v1146 = vld [vmem:[%s2 + $0x1b0] sm:$0xff]
    %v1147 = vld [vmem:[%s2 + $0x1b8] sm:$0xff]
    %v1148 = vld [vmem:[%s2 + $0x1c0] sm:$0xff]
    %v1149 = vld [vmem:[%s2 + $0x1c8] sm:$0xff]
    %v1150 = vld [vmem:[%s2 + $0x1d0] sm:$0xff]
    %v1151 = vld [vmem:[%s2 + $0x1d8] sm:$0xff]
    %v1152 = vld [vmem:[%s2 + $0x1e0] sm:$0xff]
    %v1153 = vld [vmem:[%s2 + $0x1e8] sm:$0xff]
    %v1154 = vld [vmem:[%s2 + $0x1f0] sm:$0xff]
    %v1155 = vld [vmem:[%s2 + $0x1f8] sm:$0xff]
    %v1156 = vld [vmem:[%s2 + $0x200] sm:$0xff]
    %v1157 = vld [vmem:[%s2 + $0x208] sm:$0xff]
    %v1158 = vld [vmem:[%s2 + $0x210] sm:$0xff]
    %v1159 = vld [vmem:[%s2 + $0x218] sm:$0xff]
    %v1160 = vld [vmem:[%s2 + $0x220] sm:$0xff]
    %v1161 = vld [vmem:[%s2 + $0x228] sm:$0xff]
    %v1162 = vld [vmem:[%s2 + $0x230] sm:$0xff]
    %v1163 = vld [vmem:[%s2 + $0x238] sm:$0xff]
    %v1164 = vld [vmem:[%s2 + $0x240] sm:$0xff]
    %v1165 = vld [vmem:[%s2 + $0x248] sm:$0xff]
    %v1166 = vld [vmem:[%s2 + $0x250] sm:$0xff]
    %v1167 = vld [vmem:[%s2 + $0x258] sm:$0xff]
    %v1168 = vld [vmem:[%s2 + $0x260] sm:$0xff]
    %v1169 = vld [vmem:[%s2 + $0x268] sm:$0xff]
    %v1170 = vld [vmem:[%s2 + $0x270] sm:$0xff]
    %v1171 = vld [vmem:[%s2 + $0x278] sm:$0xff]
    %v1172 = vld [vmem:[%s2 + $0x280] sm:$0xff]
    %v1173 = vld [vmem:[%s2 + $0x288] sm:$0xff]
    %v1174 = vld [vmem:[%s2 + $0x290] sm:$0xff]
    %v1175 = vld [vmem:[%s2 + $0x298] sm:$0xff]
    %v1176 = vld [vmem:[%s2 + $0x2a0] sm:$0xff]
    %v1177 = vld [vmem:[%s2 + $0x2a8] sm:$0xff]
    %v1178 = vld [vmem:[%s2 + $0x2b0] sm:$0xff]
    %v1179 = vld [vmem:[%s2 + $0x2b8] sm:$0xff]
    %v1180 = vld [vmem:[%s2 + $0x2c0] sm:$0xff]
    %v1181 = vld [vmem:[%s2 + $0x2c8] sm:$0xff]
    %v1182 = vld [vmem:[%s2 + $0x2d0] sm:$0xff]
    %v1183 = vld [vmem:[%s2 + $0x2d8] sm:$0xff]
    %v1184 = vld [vmem:[%s2 + $0x2e0] sm:$0xff]
    %v1185 = vld [vmem:[%s2 + $0x2e8] sm:$0xff]
    %v1186 = vld [vmem:[%s2 + $0x2f0] sm:$0xff]
    %v1187 = vld [vmem:[%s2 + $0x2f8] sm:$0xff]
    %1188 = vmatprep.subr.mxu0 0.0
    %1189 = vmatpush1.msra.mxu0 %v1107
    %1190 = vmatprep.subr.mxu0 0.0
    %1191 = vmatpush1.msra.mxu0 %v1106
    %1192 = vmatprep.subr.mxu0 0.0
    %1193 = vmatpush1.msra.mxu0 %v1105
    %1194 = vmatprep.subr.mxu0 0.0
    %1195 = vmatpush1.msra.mxu0 %v1104
    %1196 = vmatprep.subr.mxu0 0.0
    %1197 = vmatpush1.msra.mxu0 %v1103
    %1198 = vmatprep.subr.mxu0 0.0
    %1199 = vmatpush1.msra.mxu0 %v1102
    %1200 = vmatprep.subr.mxu0 0.0
    %1201 = vmatpush1.msra.mxu0 %v1101
    %1202 = vmatprep.subr.mxu0 0.0
    %1203 = vmatpush1.msra.mxu0 %v1100
    %1204 = vmatprep.subr.mxu0 0.0
    %1205 = vmatpush1.msra.mxu0 %v1099
    %1206 = vmatprep.subr.mxu0 0.0
    %1207 = vmatpush1.msra.mxu0 %v1098
    %1208 = vmatprep.subr.mxu0 0.0
    %1209 = vmatpush1.msra.mxu0 %v1097
    %1210 = vmatprep.subr.mxu0 0.0
    %1211 = vmatpush1.msra.mxu0 %v1096
    %1212 = vmatprep.subr.mxu0 0.0
    %1213 = vmatpush1.msra.mxu0 %v1095
    %1214 = vmatprep.subr.mxu0 0.0
    %1215 = vmatpush1.msra.mxu0 %v1094
    %1216 = vmatprep.subr.mxu0 0.0
    %1217 = vmatpush1.msra.mxu0 %v1093
    %1218 = vmatprep.subr.mxu0 0.0
    %1219 = vmatpush1.msra.mxu0 %v1092
    %1220 = vmatprep.subr.mxu0 0.0
    %1221 = vmatpush2.msra.mxu0 %v1123
    %1222 = vmatprep.subr.mxu0 0.0
    %1223 = vmatpush2.msra.mxu0 %v1122
    %1224 = vmatprep.subr.mxu0 0.0
    %1225 = vmatpush2.msra.mxu0 %v1121
    %1226 = vmatprep.subr.mxu0 0.0
    %1227 = vmatpush2.msra.mxu0 %v1120
    %1228 = vmatprep.subr.mxu0 0.0
    %1229 = vmatpush2.msra.mxu0 %v1119
    %1230 = vmatprep.subr.mxu0 0.0
    %1231 = vmatpush2.msra.mxu0 %v1118
    %1232 = vmatprep.subr.mxu0 0.0
    %1233 = vmatpush2.msra.mxu0 %v1117
    %1234 = vmatprep.subr.mxu0 0.0
    %1235 = vmatpush2.msra.mxu0 %v1116
    %1236 = vmatprep.subr.mxu0 0.0
    %1237 = vmatpush2.msra.mxu0 %v1115
    %1238 = vmatprep.subr.mxu0 0.0
    %1239 = vmatpush2.msra.mxu0 %v1114
    %1240 = vmatprep.subr.mxu0 0.0
    %1241 = vmatpush2.msra.mxu0 %v1113
    %1242 = vmatprep.subr.mxu0 0.0
    %1243 = vmatpush2.msra.mxu0 %v1112
    %1244 = vmatprep.subr.mxu0 0.0
    %1245 = vmatpush2.msra.mxu0 %v1111
    %1246 = vmatprep.subr.mxu0 0.0
    %1247 = vmatpush2.msra.mxu0 %v1110
    %1248 = vmatprep.subr.mxu0 0.0
    %1249 = vmatpush2.msra.mxu0 %v1109
    %1250 = vmatprep.subr.mxu0 0.0
    %1251 = vmatpush2.msra.mxu0 %v1108
    %1252 = vmatprep.mubr.f32.mxu0 %v1081
    %1253 = vmatmul.mubr.f32.gmra.mxu0 %v1080
    %v1254 = vpop.f32.mrf.mxu0
    %v1255 = vadd.f32 0.0, %v1254
    %v1256 = vpop.f32.mrf.mxu0
    %1257 = vmatprep.mubr.f32.mxu0 %v1087
    %1258 = vmatmul.mubr.f32.gmra.mxu0 %v1086
    %v1259 = vpop.f32.mrf.mxu0
    %v1260 = vadd.f32 0.0, %v1259
    %v1261 = vpop.f32.mrf.mxu0
    %1262 = vdwg.mxu0
    %1263 = vmatprep.subr.mxu0 0.0
    %1264 = vmatpush1.msra.mxu0 %v1139
    %1265 = vmatprep.subr.mxu0 0.0
    %1266 = vmatpush1.msra.mxu0 %v1138
    %1267 = vmatprep.subr.mxu0 0.0
    %1268 = vmatpush1.msra.mxu0 %v1137
    %1269 = vmatprep.subr.mxu0 0.0
    %1270 = vmatpush1.msra.mxu0 %v1136
    %1271 = vmatprep.subr.mxu0 0.0
    %1272 = vmatpush1.msra.mxu0 %v1135
    %1273 = vmatprep.subr.mxu0 0.0
    %1274 = vmatpush1.msra.mxu0 %v1134
    %1275 = vmatprep.subr.mxu0 0.0
    %1276 = vmatpush1.msra.mxu0 %v1133
    %1277 = vmatprep.subr.mxu0 0.0
    %1278 = vmatpush1.msra.mxu0 %v1132
    %1279 = vmatprep.subr.mxu0 0.0
    %1280 = vmatpush1.msra.mxu0 %v1131
    %1281 = vmatprep.subr.mxu0 0.0
    %1282 = vmatpush1.msra.mxu0 %v1130
    %1283 = vmatprep.subr.mxu0 0.0
    %1284 = vmatpush1.msra.mxu0 %v1129
    %1285 = vmatprep.subr.mxu0 0.0
    %1286 = vmatpush1.msra.mxu0 %v1128
    %1287 = vmatprep.subr.mxu0 0.0
    %1288 = vmatpush1.msra.mxu0 %v1127
    %1289 = vmatprep.subr.mxu0 0.0
    %1290 = vmatpush1.msra.mxu0 %v1126
    %1291 = vmatprep.subr.mxu0 0.0
    %1292 = vmatpush1.msra.mxu0 %v1125
    %1293 = vmatprep.subr.mxu0 0.0
    %1294 = vmatpush1.msra.mxu0 %v1124
    %1295 = vmatprep.subr.mxu0 0.0
    %1296 = vmatpush2.msra.mxu0 %v1155
    %1297 = vmatprep.subr.mxu0 0.0
    %1298 = vmatpush2.msra.mxu0 %v1154
    %1299 = vmatprep.subr.mxu0 0.0
    %1300 = vmatpush2.msra.mxu0 %v1153
    %1301 = vmatprep.subr.mxu0 0.0
    %1302 = vmatpush2.msra.mxu0 %v1152
    %1303 = vmatprep.subr.mxu0 0.0
    %1304 = vmatpush2.msra.mxu0 %v1151
    %1305 = vmatprep.subr.mxu0 0.0
    %1306 = vmatpush2.msra.mxu0 %v1150
    %1307 = vmatprep.subr.mxu0 0.0
    %1308 = vmatpush2.msra.mxu0 %v1149
    %1309 = vmatprep.subr.mxu0 0.0
    %1310 = vmatpush2.msra.mxu0 %v1148
    %1311 = vmatprep.subr.mxu0 0.0
    %1312 = vmatpush2.msra.mxu0 %v1147
    %1313 = vmatprep.subr.mxu0 0.0
    %1314 = vmatpush2.msra.mxu0 %v1146
    %1315 = vmatprep.subr.mxu0 0.0
    %1316 = vmatpush2.msra.mxu0 %v1145
    %1317 = vmatprep.subr.mxu0 0.0
    %1318 = vmatpush2.msra.mxu0 %v1144
    %1319 = vmatprep.subr.mxu0 0.0
    %1320 = vmatpush2.msra.mxu0 %v1143
    %1321 = vmatprep.subr.mxu0 0.0
    %1322 = vmatpush2.msra.mxu0 %v1142
    %1323 = vmatprep.subr.mxu0 0.0
    %1324 = vmatpush2.msra.mxu0 %v1141
    %1325 = vmatprep.subr.mxu0 0.0
    %1326 = vmatpush2.msra.mxu0 %v1140
    %1327 = vmatprep.mubr.f32.mxu0 %v1083
    %1328 = vmatmul.mubr.f32.gmra.mxu0 %v1082
    %v1329 = vpop.f32.mrf.mxu0
    %v1330 = vadd.f32 %v1255, %v1329
    %v1331 = vpop.f32.mrf.mxu0
    %1332 = vmatprep.mubr.f32.mxu0 %v1089
    %1333 = vmatmul.mubr.f32.gmra.mxu0 %v1088
    %v1334 = vpop.f32.mrf.mxu0
    %v1335 = vadd.f32 %v1260, %v1334
    %v1336 = vpop.f32.mrf.mxu0
    %1337 = vdwg.mxu0
    %1338 = vmatprep.subr.mxu0 0.0
    %1339 = vmatpush1.msra.mxu0 %v1171
    %1340 = vmatprep.subr.mxu0 0.0
    %1341 = vmatpush1.msra.mxu0 %v1170
    %1342 = vmatprep.subr.mxu0 0.0
    %1343 = vmatpush1.msra.mxu0 %v1169
    %1344 = vmatprep.subr.mxu0 0.0
    %1345 = vmatpush1.msra.mxu0 %v1168
    %1346 = vmatprep.subr.mxu0 0.0
    %1347 = vmatpush1.msra.mxu0 %v1167
    %1348 = vmatprep.subr.mxu0 0.0
    %1349 = vmatpush1.msra.mxu0 %v1166
    %1350 = vmatprep.subr.mxu0 0.0
    %1351 = vmatpush1.msra.mxu0 %v1165
    %1352 = vmatprep.subr.mxu0 0.0
    %1353 = vmatpush1.msra.mxu0 %v1164
    %1354 = vmatprep.subr.mxu0 0.0
    %1355 = vmatpush1.msra.mxu0 %v1163
    %1356 = vmatprep.subr.mxu0 0.0
    %1357 = vmatpush1.msra.mxu0 %v1162
    %1358 = vmatprep.subr.mxu0 0.0
    %1359 = vmatpush1.msra.mxu0 %v1161
    %1360 = vmatprep.subr.mxu0 0.0
    %1361 = vmatpush1.msra.mxu0 %v1160
    %1362 = vmatprep.subr.mxu0 0.0
    %1363 = vmatpush1.msra.mxu0 %v1159
    %1364 = vmatprep.subr.mxu0 0.0
    %1365 = vmatpush1.msra.mxu0 %v1158
    %1366 = vmatprep.subr.mxu0 0.0
    %1367 = vmatpush1.msra.mxu0 %v1157
    %1368 = vmatprep.subr.mxu0 0.0
    %1369 = vmatpush1.msra.mxu0 %v1156
    %1370 = vmatprep.subr.mxu0 0.0
    %1371 = vmatpush2.msra.mxu0 %v1187
    %1372 = vmatprep.subr.mxu0 0.0
    %1373 = vmatpush2.msra.mxu0 %v1186
    %1374 = vmatprep.subr.mxu0 0.0
    %1375 = vmatpush2.msra.mxu0 %v1185
    %1376 = vmatprep.subr.mxu0 0.0
    %1377 = vmatpush2.msra.mxu0 %v1184
    %1378 = vmatprep.subr.mxu0 0.0
    %1379 = vmatpush2.msra.mxu0 %v1183
    %1380 = vmatprep.subr.mxu0 0.0
    %1381 = vmatpush2.msra.mxu0 %v1182
    %1382 = vmatprep.subr.mxu0 0.0
    %1383 = vmatpush2.msra.mxu0 %v1181
    %1384 = vmatprep.subr.mxu0 0.0
    %1385 = vmatpush2.msra.mxu0 %v1180
    %1386 = vmatprep.subr.mxu0 0.0
    %1387 = vmatpush2.msra.mxu0 %v1179
    %1388 = vmatprep.subr.mxu0 0.0
    %1389 = vmatpush2.msra.mxu0 %v1178
    %1390 = vmatprep.subr.mxu0 0.0
    %1391 = vmatpush2.msra.mxu0 %v1177
    %1392 = vmatprep.subr.mxu0 0.0
    %1393 = vmatpush2.msra.mxu0 %v1176
    %1394 = vmatprep.subr.mxu0 0.0
    %1395 = vmatpush2.msra.mxu0 %v1175
    %1396 = vmatprep.subr.mxu0 0.0
    %1397 = vmatpush2.msra.mxu0 %v1174
    %1398 = vmatprep.subr.mxu0 0.0
    %1399 = vmatpush2.msra.mxu0 %v1173
    %1400 = vmatprep.subr.mxu0 0.0
    %1401 = vmatpush2.msra.mxu0 %v1172
    %1402 = vmatprep.mubr.f32.mxu0 %v1085
    %1403 = vmatmul.mubr.f32.gmra.mxu0 %v1084
    %v1404 = vpop.f32.mrf.mxu0
    %v1405 = vadd.f32 %v1330, %v1404
    %v1406 = vpop.f32.mrf.mxu0
    %1407 = vmatprep.mubr.f32.mxu0 %v1091
    %1408 = vmatmul.mubr.f32.gmra.mxu0 %v1090
    %v1409 = vpop.f32.mrf.mxu0
    %v1410 = vadd.f32 %v1335, %v1409
    %v1411 = vpop.f32.mrf.mxu0
    %1412 = vdwg.mxu0
    %1413 = vst [vmem:[#allocation2] sm:$0xff] 0.0
    %1414 = vst [vmem:[#allocation2 + $0x8] sm:$0xff] 0.0
    %1415 = vst [vmem:[#allocation2 + $0x10] sm:$0xff] 0.0
    %1416 = vst [vmem:[#allocation2 + $0x18] sm:$0xff] 0.0
    %1417 = vst [vmem:[#allocation2 + $0x20] sm:$0xff] 0.0
    %1418 = vst [vmem:[#allocation2 + $0x28] sm:$0xff] 0.0
    %1419 = vst [vmem:[#allocation2 + $0x8] sm:$0xff] %v1405
    %1420 = vst [vmem:[#allocation2 + $0x20] sm:$0xff] %v1410
    %v1421 = vadd.f32 %v31, 0.0
    %v1422 = vld [vmem:[#allocation2 + $0x6] sm:$0xff]
    %v1423 = vld [vmem:[#allocation2 + $0xe] sm:$0x3]
    %v1424 = vld [vmem:[#allocation2 + $0x1e] sm:$0xff]
    %v1425 = vld [vmem:[#allocation2 + $0x26] sm:$0x3]
    %v1426 = vadd.f32 %v1422, 0.0
    %v1427 = vadd.f32 %v1423, 0.0
    %v1428 = vadd.f32 %v1424, 0.0
    %v1429 = vadd.f32 %v1425, 0.0
    %v1430 = vld [vmem:[#allocation2 + $0x7] sm:$0xff]
    %v1431 = vld [vmem:[#allocation2 + $0xf] sm:$0x3]
    %v1432 = vld [vmem:[#allocation2 + $0x1f] sm:$0xff]
    %v1433 = vld [vmem:[#allocation2 + $0x27] sm:$0x3]
    %1438 = vrot.lane.b32.xlu0 %v1430, 118
    %v1439 = vpop.permute.xlu0 %1438
    %1440 = vrot.lane.b32.xlu0 %v1431, 118
    %v1441 = vpop.permute.xlu0 %1440
    %1442 = vrot.lane.b32.xlu0 %v1432, 118
    %v1443 = vpop.permute.xlu0 %1442
    %1444 = vrot.lane.b32.xlu0 %v1433, 118
    %v1445 = vpop.permute.xlu0 %1444
    %v1450 = vadd.f32 %v1426, %v1439
    %v1451 = vadd.f32 %v1427, %v1441
    %v1452 = vadd.f32 %v1428, %v1443
    %v1453 = vadd.f32 %v1429, %v1445
    %v1454 = vld [vmem:[#allocation2 + $0x8] sm:$0xff]
    %v1455 = vld [vmem:[#allocation2 + $0x10] sm:$0x3]
    %v1456 = vld [vmem:[#allocation2 + $0x20] sm:$0xff]
    %v1457 = vld [vmem:[#allocation2 + $0x28] sm:$0x3]
    %1462 = vrot.lane.b32.xlu0 %v1454, 108
    %v1463 = vpop.permute.xlu0 %1462
    %1464 = vrot.lane.b32.xlu0 %v1455, 108
    %v1465 = vpop.permute.xlu0 %1464
    %1466 = vrot.lane.b32.xlu0 %v1456, 108
    %v1467 = vpop.permute.xlu0 %1466
    %1468 = vrot.lane.b32.xlu0 %v1457, 108
    %v1469 = vpop.permute.xlu0 %1468
    %v1474 = vadd.f32 %v1450, %v1463
    %v1475 = vadd.f32 %v1451, %v1465
    %v1476 = vadd.f32 %v1452, %v1467
    %v1477 = vadd.f32 %v1453, %v1469
    %v1478 = vadd.f32 %v1474, %v29
    %v1479 = vadd.f32 %v1475, %v29
    %v1480 = vadd.f32 %v1476, %v29
    %v1481 = vadd.f32 %v1477, %v29
    %v1482 = vmax.f32 %v1478, 0.0
    %v1483 = vmax.f32 %v1479, 0.0
    %v1484 = vmax.f32 %v1480, 0.0
    %v1485 = vmax.f32 %v1481, 0.0
    %vm1486 = vcmask 80896
    %v1487 = vsel %vm1486, %v1482, -inf
    %vm1488 = vcmask 74752
    %v1489 = vsel %vm1488, %v1483, -inf
    %v1490 = vmax.f32 %v1487, %v1489
    %v1491 = vrot.slane %v1490, 4
    %v1492 = vmax.f32 %v1490, %v1491
    %v1493 = vrot.slane %v1492, 2
    %v1494 = vmax.f32 %v1492, %v1493
    %v1495 = vrot.slane %v1494, 1
    %v1496 = vmax.f32 %v1494, %v1495
    %v1497 = vsel %vm1486, %v1484, -inf
    %v1498 = vsel %vm1488, %v1485, -inf
    %v1499 = vmax.f32 %v1497, %v1498
    %v1500 = vrot.slane %v1499, 4
    %v1501 = vmax.f32 %v1499, %v1500
    %v1502 = vrot.slane %v1501, 2
    %v1503 = vmax.f32 %v1501, %v1502
    %v1504 = vrot.slane %v1503, 1
    %v1505 = vmax.f32 %v1503, %v1504
    %v1508 = vsel %vm458, %v1505, %v1496
    %v1510 = vmul.f32 %v1077, %v1508
    %v1511 = vmul.f32 %v1510, %v30
    %v1512 = vsel %vm1488, %v1511, 0.0
    %1513 = vadd.xlane.f32.xlu0 %v1512
    %v1514 = vpop.xlane.xlu0 %1513
    %v1515 = vadd.f32 %v1421, %v1514
    %v1516 = vld [vmem:[#allocation2 + $0xe] sm:$0x1]
    %v1517 = vld [vmem:[#allocation2 + $0x26] sm:$0x1]
    %v1518 = vadd.f32 %v1516, 0.0
    %v1519 = vadd.f32 %v1517, 0.0
    %v1520 = vld [vmem:[#allocation2 + $0xf] sm:$0x1]
    %v1521 = vld [vmem:[#allocation2 + $0x27] sm:$0x1]
    %1524 = vrot.lane.b32.xlu0 %v1520, 118
    %v1525 = vpop.permute.xlu0 %1524
    %1526 = vrot.lane.b32.xlu0 %v1521, 118
    %v1527 = vpop.permute.xlu0 %1526
    %v1530 = vadd.f32 %v1518, %v1525
    %v1531 = vadd.f32 %v1519, %v1527
    %v1532 = vld [vmem:[#allocation2 + $0x10] sm:$0x1]
    %v1533 = vld [vmem:[#allocation2 + $0x28] sm:$0x1]
    %1536 = vrot.lane.b32.xlu0 %v1532, 108
    %v1537 = vpop.permute.xlu0 %1536
    %1538 = vrot.lane.b32.xlu0 %v1533, 108
    %v1539 = vpop.permute.xlu0 %1538
    %v1542 = vadd.f32 %v1530, %v1537
    %v1543 = vadd.f32 %v1531, %v1539
    %v1544 = vld [vmem:[#allocation2 + $0x9] sm:$0xff]
    %v1545 = vld [vmem:[#allocation2 + $0x11] sm:$0x1]
    %v1546 = vld [vmem:[#allocation2 + $0x21] sm:$0xff]
    %v1547 = vld [vmem:[#allocation2 + $0x29] sm:$0x1]
    %1552 = vrot.lane.b32.xlu0 %v1544, 98
    %v1553 = vpop.permute.xlu0 %1552
    %1554 = vrot.lane.b32.xlu0 %v1545, 98
    %v1555 = vpop.permute.xlu0 %1554
    %1556 = vrot.lane.b32.xlu0 %v1546, 98
    %v1557 = vpop.permute.xlu0 %1556
    %1558 = vrot.lane.b32.xlu0 %v1547, 98
    %v1559 = vpop.permute.xlu0 %1558
    %v1564 = vadd.f32 %v1474, %v1553
    %v1565 = vadd.f32 %v1542, %v1555
    %v1566 = vadd.f32 %v1476, %v1557
    %v1567 = vadd.f32 %v1543, %v1559
    %1569 = vrot.lane.b32.xlu0 %v29, 20
    %v1570 = vpop.permute.xlu0 %1569
    %v1572 = vadd.f32 %v1564, %v1570
    %v1573 = vadd.f32 %v1565, %v1570
    %v1574 = vadd.f32 %v1566, %v1570
    %v1575 = vadd.f32 %v1567, %v1570
    %v1576 = vmax.f32 %v1572, 0.0
    %v1577 = vmax.f32 %v1573, 0.0
    %v1578 = vmax.f32 %v1574, 0.0
    %v1579 = vmax.f32 %v1575, 0.0
    %vm1580 = vcmask 326896
    %v1581 = vsel %vm1580, %v1576, -inf
    %vm1582 = vcmask 319728
    %v1583 = vsel %vm1582, %v1577, -inf
    %v1584 = vmax.f32 %v1581, %v1583
    %v1585 = vrot.slane %v1584, 4
    %v1586 = vmax.f32 %v1584, %v1585
    %v1587 = vrot.slane %v1586, 2
    %v1588 = vmax.f32 %v1586, %v1587
    %v1589 = vrot.slane %v1588, 1
    %v1590 = vmax.f32 %v1588, %v1589
    %v1591 = vsel %vm1580, %v1578, -inf
    %v1592 = vsel %vm1582, %v1579, -inf
    %v1593 = vmax.f32 %v1591, %v1592
    %v1594 = vrot.slane %v1593, 4
    %v1595 = vmax.f32 %v1593, %v1594
    %v1596 = vrot.slane %v1595, 2
    %v1597 = vmax.f32 %v1595, %v1596
    %v1598 = vrot.slane %v1597, 1
    %v1599 = vmax.f32 %v1597, %v1598
    %v1602 = vsel %vm458, %v1599, %v1590
    %1603 = vrot.lane.b32.xlu0 %v1602, 108
    %v1604 = vpop.permute.xlu0 %1603
    %v1606 = vmul.f32 %v1077, %v1604
    %v1607 = vmul.f32 %v1606, %v30
    %1609 = vrot.lane.b32.xlu0 %v1607, 118
    %v1610 = vpop.permute.xlu0 %1609
    %v1612 = vsel %vm1488, %v1610, 0.0
    %1613 = vadd.xlane.f32.xlu0 %v1612
    %v1614 = vpop.xlane.xlu0 %1613
    %v1615 = vadd.f32 %v1515, %v1614
    %v1616 = vld [vmem:[#allocation2 + $0xa] sm:$0xff]
    %v1617 = vld [vmem:[#allocation2 + $0x22] sm:$0xff]
    %1620 = vrot.lane.b32.xlu0 %v1616, 88
    %v1621 = vpop.permute.xlu0 %1620
    %1622 = vrot.lane.b32.xlu0 %v1617, 88
    %v1623 = vpop.permute.xlu0 %1622
    %v1626 = vadd.f32 %v1564, %v1621
    %v1627 = vadd.f32 %v1566, %v1623
    %1628 = vrot.lane.b32.xlu0 %v29, 50
    %v1629 = vpop.permute.xlu0 %1628
    %v1631 = vadd.f32 %v1626, %v1629
    %v1632 = vadd.f32 %v1627, %v1629
    %v1633 = vmax.f32 %v1631, 0.0
    %v1634 = vmax.f32 %v1632, 0.0
    %vm1635 = vcmask 654896
    %v1636 = vsel %vm1635, %v1633, -inf
    %v1637 = vrot.slane %v1636, 4
    %v1638 = vmax.f32 %v1636, %v1637
    %v1639 = vrot.slane %v1638, 2
    %v1640 = vmax.f32 %v1638, %v1639
    %v1641 = vrot.slane %v1640, 1
    %v1642 = vmax.f32 %v1640, %v1641
    %v1643 = vsel %vm1635, %v1634, -inf
    %v1644 = vrot.slane %v1643, 4
    %v1645 = vmax.f32 %v1643, %v1644
    %v1646 = vrot.slane %v1645, 2
    %v1647 = vmax.f32 %v1645, %v1646
    %v1648 = vrot.slane %v1647, 1
    %v1649 = vmax.f32 %v1647, %v1648
    %v1652 = vsel %vm458, %v1649, %v1642
    %1653 = vrot.lane.b32.xlu0 %v1652, 78
    %v1654 = vpop.permute.xlu0 %1653
    %v1656 = vmul.f32 %v1077, %v1654
    %v1657 = vmul.f32 %v1656, %v30
    %1659 = vrot.lane.b32.xlu0 %v1657, 108
    %v1660 = vpop.permute.xlu0 %1659
    %v1662 = vsel %vm1488, %v1660, 0.0
    %1663 = vadd.xlane.f32.xlu0 %v1662
    %v1664 = vpop.xlane.xlu0 %1663
    %v1665 = vadd.f32 %v1615, %v1664
    %v1666 = vld [vmem:[%s6] sm:$0x3]
    %v1667 = vmax.f32 %v1665, 0.0
    %v1668 = vmul.f32 %v1665, %v1666
    %v1669 = vsub.f32 %v1667, %v1668
    %v1670 = vand.u32 2147483647, %v1665
    %v1671 = vsub.f32 0.0, %v1670
    %v1672 = vmul.f32 %v1671, 1.442695
    %v1673 = vpow.pop %v1672
    %v1674 = vadd.f32 %v1673, 1.0
    %v1675 = vlog2.pop %v1674
    %v1676 = vmul.f32 %v1675, 0.6931472
    %v1677 = vadd.f32 %v1669, %v1676
    %vm1678 = vcmask 1024
    %v1679 = vsel %vm1678, %v1677, 0.0
    %1680 = vadd.xlane.f32.xlu0 %v1679
    %v1681 = vpop.xlane.xlu0 %1680
    %v1682 = vrot.slane %v1681, 4
    %v1683 = vadd.f32 %v1681, %v1682
    %v1684 = vrot.slane %v1683, 2
    %v1685 = vadd.f32 %v1683, %v1684
    %v1686 = vrot.slane %v1685, 1
    %v1687 = vadd.f32 %v1685, %v1686
    %s1688 = vtos %v1687
    %v1689 = vstv %s1688
    %v1690 = vrcp.pop 2.0
    %v1691 = vmul.f32 %v1689, %v1690
    %vm1692 = vcmask 0
    %1693 = vst.msk [vmem:[#allocation3] sm:$0x1] %vm1692, %v1691
    // Predicated region
    $region30: #{tpu_custom_call.1} parent=1 // pred_check
      _
    $region31: #{tpu_custom_call.1} parent=1 // pred_check_branch
      %1695 = sbr.rel (0) target = $region33
    $region32: #{tpu_custom_call.1} parent=1 // pred_region
      %s1697 = ssub.s32 16, 16
      %1698 = vsyncadd [#allocation4], %s1697
      %s1700 = sshll.u32 [#allocation3], 4
      %s1701 = int_to_ptr.vmem [resolvable:$true] %s1700
      %1703 = dma.vmem_to_hbm [thread:$0]  %s1701, 16, %s7, [#allocation4]
    $region33: #{tpu_custom_call.1} parent=1 // pred_fallthru
      _
    // Predicated region
    $region34: #{tpu_custom_call.1} parent=1 // pred_check
      _
    $region35: #{tpu_custom_call.1} parent=1 // pred_check_branch
      %1705 = sbr.rel (0) target = $region37
    $region36: #{tpu_custom_call.1} parent=1 // pred_region
      %1706 = dma.done [#allocation4], 16
    $region37: #{tpu_custom_call.1} parent=1 // pred_fallthru
      _
    %1707 = vsyncpa [#allocation4], 1

</llo_original>
